<compile_context>
chip_gen: v7x
topology: tpu7x:2x2x1
jax: 0.10.0
libtpu: 0.0.40
codegen_flags: <defaults>
</compile_context>

<pallas_src>
import jax
import jax.numpy as jnp
from jax.experimental import pallas as pl
from jax.experimental.pallas import tpu as pltpu


def _round_up(x, m):
    return -(-x // m) * m


def mf_dot_kernel(u_ref, v_ref, s_ref, out_ref):
    # u_ref, v_ref: (R, 128*F)  -- 128 samples per row, F contiguous factors each.
    # s_ref:        (128*F, 128) constant 0/1 segment-sum selector.
    # out_ref:      (R, 128)     lane-dense per-sample dot products.
    prod = u_ref[...].astype(jnp.float32) * v_ref[...].astype(jnp.float32)
    out_ref[...] = jnp.dot(
        prod, s_ref[...], preferred_element_type=jnp.float32
    ).astype(out_ref.dtype)


def _pick_tile_b(B, F, itemsize):
    """Samples per grid step, from a VMEM budget for the double-buffered inputs."""
    budget = 12 << 20                                       # 2 inputs x 2 buffers
    t = max(1024, (budget // (2 * 2 * F * itemsize)) // 1024 * 1024)
    b_ceil = _round_up(B, 1024)
    if b_ceil >= 4 * 1024:
        # Keep >= 4 grid steps so v7x megacore sharding / DMA pipelining still help.
        t = min(t, max(1024, (b_ceil // 4) // 1024 * 1024))
    return min(t, b_ceil)


def matrix_factorization_forward(user, item, user_factors, item_factors, *,
                                 tile_b=None):
    """rating[b] = sum_f user_factors[user[b], f] * item_factors[item[b], f]."""
    B = int(user.shape[0])
    F = int(user_factors.shape[1])
    itemsize = jnp.dtype(user_factors.dtype).itemsize       # bf16 tables halve DMA

    if tile_b is None:
        tile_b = _pick_tile_b(B, F, itemsize)
    else:
        # Force legality: multiple of 1024 => block rows are a multiple of 8 and
        # samples a multiple of 128 (the (8, 128) BlockSpec constraint).
        tile_b = _round_up(max(int(tile_b), 1024), 1024)
    b_pad = _round_up(max(B, tile_b), tile_b)
    grid = b_pad // tile_b
    rows = tile_b // 128

    # --- bulk gathers: pad the *indices* (cheap), not the gathered floats.
    # (jnp.take clamps out-of-range indices; padded entries use index 0.)
    user_p = jnp.pad(user.astype(jnp.int32), (0, b_pad - B))
    item_p = jnp.pad(item.astype(jnp.int32), (0, b_pad - B))
    ug = jnp.take(user_factors, user_p, axis=0)              # (b_pad, F)
    vg = jnp.take(item_factors, item_p, axis=0)              # (b_pad, F)

    # Free row-major regroup: 128 samples (x F contiguous factors) per row.
    ug2 = ug.reshape(b_pad // 128, 128 * F)
    vg2 = vg.reshape(b_pad // 128, 128 * F)

    # Constant segment-sum selector: S[c, s] = 1 iff column c belongs to sample s.
    # Constant-folded by XLA; DMA'd into VMEM once (index map is constant).
    sel = (jnp.arange(128 * F, dtype=jnp.int32)[:, None] // F
           == jnp.arange(128, dtype=jnp.int32)[None, :]).astype(jnp.float32)

    # VMEM working set: double-buffered inputs + selector + output + f32 product.
    ws = (2 * 2 * tile_b * F * itemsize
          + 2 * (128 * F) * 128 * 4
          + 2 * rows * 128 * 4
          + tile_b * F * 4)
    vmem_limit = int(min(ws + (8 << 20), 48 << 20))

    out = pl.pallas_call(
        mf_dot_kernel,
        out_shape=jax.ShapeDtypeStruct((b_pad // 128, 128), jnp.float32),
        grid=(grid,),
        in_specs=[
            pl.BlockSpec((rows, 128 * F), lambda i: (i, 0)),
            pl.BlockSpec((rows, 128 * F), lambda i: (i, 0)),
            pl.BlockSpec((128 * F, 128), lambda i: (0, 0)),   # fetched once, reused
        ],
        out_specs=pl.BlockSpec((rows, 128), lambda i: (i, 0)),
        compiler_params=pltpu.CompilerParams(
            dimension_semantics=("parallel",),
            vmem_limit_bytes=vmem_limit),
    )(ug2, vg2, sel)

    # (b_pad // 128, 128) -> (b_pad,) is a free row-major reshape; drop padding.
    return out.reshape(-1)[:B]


if __name__ == "__main__":
    key = jax.random.PRNGKey(0)
    n_users, n_items, n_factors = 16, 24, 32   # small, kernel-friendly demo sizes
    B = 8

    k1, k2, k3, k4 = jax.random.split(key, 4)
    # nn.Embedding weights with .uniform_(0, 0.05) as in the module __init__.
    user_factors = jax.random.uniform(k1, (n_users, n_factors),
                                      dtype=jnp.float32, minval=0.0, maxval=0.05)
    item_factors = jax.random.uniform(k2, (n_items, n_factors),
                                      dtype=jnp.float32, minval=0.0, maxval=0.05)
    user = jax.random.randint(k3, (B,), 0, n_users, dtype=jnp.int32)
    item = jax.random.randint(k4, (B,), 0, n_items, dtype=jnp.int32)

    fwd = jax.jit(matrix_factorization_forward)
    rating = jax.block_until_ready(fwd(user, item, user_factors, item_factors))

    # Pure-JAX reference for correctness.
    ref = jnp.sum(user_factors[user] * item_factors[item], axis=1)
    assert rating.shape == (B,), rating.shape
    assert jnp.allclose(rating, ref, atol=1e-5, rtol=1e-5), (rating, ref)
    print("KERNEL_OK")
</pallas_src>

<mosaic_0001>
module attributes {stable_mosaic.version = 11 : i64} {
  func.func @mf_dot_kernel(%arg0: i32, %arg1: memref<8x4096xf32, #tpu.memory_space<vmem>>, %arg2: memref<8x4096xf32, #tpu.memory_space<vmem>>, %arg3: memref<4096x128xf32, #tpu.memory_space<vmem>>, %arg4: memref<8x128xf32, #tpu.memory_space<vmem>>) attributes {dimension_semantics = [#tpu.dimension_semantics<parallel>], iteration_bounds = array<i64: 1>, scalar_prefetch = 0 : i64, scratch_operands = 0 : i64, tpu.core_type = #tpu.core_type<tc>, window_params = [{transform_indices = @transform_0, window_bounds = array<i64: 8, 4096>}, {transform_indices = @transform_1, window_bounds = array<i64: 8, 4096>}, {pipeline_mode = #tpu.pipeline_mode<synchronous>, transform_indices = @transform_2, window_bounds = array<i64: 4096, 128>}, {transform_indices = @transform_3, window_bounds = array<i64: 8, 128>}]} {
    %c0 = arith.constant 0 : index
    %c0_0 = arith.constant 0 : index
    %0 = vector.load %arg1[%c0, %c0_0] : memref<8x4096xf32, #tpu.memory_space<vmem>>, vector<8x4096xf32>
    %c0_1 = arith.constant 0 : index
    %c0_2 = arith.constant 0 : index
    %1 = vector.load %arg2[%c0_1, %c0_2] : memref<8x4096xf32, #tpu.memory_space<vmem>>, vector<8x4096xf32>
    %2 = arith.mulf %0, %1 : vector<8x4096xf32>
    %c0_3 = arith.constant 0 : index
    %c0_4 = arith.constant 0 : index
    %3 = vector.load %arg3[%c0_3, %c0_4] : memref<4096x128xf32, #tpu.memory_space<vmem>>, vector<4096x128xf32>
    %cst = arith.constant dense<0.000000e+00> : vector<8x128xf32>
    %4 = tpu.matmul %2, %3, %cst {dimension_numbers = #tpu.dot_dimension_numbers<[1], [0], [0], [1], [0, 0, 1, 1], [], []>} : vector<8x4096xf32>, vector<4096x128xf32>, vector<8x128xf32> -> vector<8x128xf32>
    %c0_5 = arith.constant 0 : index
    %c0_6 = arith.constant 0 : index
    %5 = vector.load %arg4[%c0_5, %c0_6] : memref<8x128xf32, #tpu.memory_space<vmem>>, vector<8x128xf32>
    tpu.vector_store %arg4[%c0_5, %c0_6], %4 {strides = array<i32>} : memref<8x128xf32, #tpu.memory_space<vmem>>, vector<8x128xf32>,
    return
  }
  func.func @transform_0(%arg0: i32) -> (i32, i32) {
    %c0_i32 = arith.constant 0 : i32
    %c0_i32_0 = arith.constant 0 : i32
    return %arg0, %c0_i32 : i32, i32
  }
  func.func @transform_1(%arg0: i32) -> (i32, i32) {
    %c0_i32 = arith.constant 0 : i32
    %c0_i32_0 = arith.constant 0 : i32
    return %arg0, %c0_i32 : i32, i32
  }
  func.func @transform_2(%arg0: i32) -> (i32, i32) {
    %c0_i32 = arith.constant 0 : i32
    %c0_i32_0 = arith.constant 0 : i32
    %c0_i32_1 = arith.constant 0 : i32
    return %c0_i32, %c0_i32_0 : i32, i32
  }
  func.func @transform_3(%arg0: i32) -> (i32, i32) {
    %c0_i32 = arith.constant 0 : i32
    %c0_i32_0 = arith.constant 0 : i32
    return %arg0, %c0_i32 : i32, i32
  }
}

</mosaic_0001>

<llo_original>
// kernel: matrix_factorization_forward.1
$region0: #{matrix_factorization_forward.1}
  #allocation0 [shape = 'u32[]', space=smem, size = 0x4, offset = 0x4, fixed_abs, tag = 'smem constant byte address 0x4 - core index']
  #allocation1 [shape = 'u32[144,128]{1,0:T(1,128)}', space=vmem, size = 0x12000, scoped, tag = 'internal scratch']
  %s0 = inlined_call_operand.vmem [shape: f32[8,4096], index: 0, kind: input, shape index: {}]
  %s1 = inlined_call_operand.vmem [shape: f32[8,4096], index: 1, kind: input, shape index: {}]
  %s2 = inlined_call_operand.vmem [shape: f32[4096,128], index: 2, kind: input, shape index: {}]
  %s3 = inlined_call_operand.vmem [shape: f32[8,128], index: 3, kind: output, shape index: {}]
  %s4 = sld [smem:[#allocation0]]
  $region22: #{matrix_factorization_forward.1} parent=0
    _
  %s6 = ssub.s32 1, %s4
  %s7 = scalar_select 0, %s6, %s4
  // Predicated region
  $region2: #{matrix_factorization_forward.1} parent=0 // pred_check
    _
  $region3: #{matrix_factorization_forward.1} parent=0 // pred_check_branch
    %9 = sbr.rel (0) target = $region5
  $region4: #{matrix_factorization_forward.1} parent=0 // pred_region
    _
  $region5: #{matrix_factorization_forward.1} parent=0 // pred_fallthru
    _
  // Predicated region
  $region6: #{matrix_factorization_forward.1} parent=0 // pred_check
    _
  $region7: #{matrix_factorization_forward.1} parent=0 // pred_check_branch
    %11 = sbr.rel (0) target = $region9
  $region8: #{matrix_factorization_forward.1} parent=0 // pred_region
    _
  $region9: #{matrix_factorization_forward.1} parent=0 // pred_fallthru
    _
  // Predicated region
  $region10: #{matrix_factorization_forward.1} parent=0 // pred_check
    _
  $region11: #{matrix_factorization_forward.1} parent=0 // pred_check_branch
    %13 = sbr.rel (0) target = $region13
  $region12: #{matrix_factorization_forward.1} parent=0 // pred_region
    _
  $region13: #{matrix_factorization_forward.1} parent=0 // pred_fallthru
    _
  %v14 = vld [vmem:[%s0] sm:$0xff]
  %v15 = vld [vmem:[%s0 + $0x8] sm:$0xff]
  %v16 = vld [vmem:[%s0 + $0x10] sm:$0xff]
  %v17 = vld [vmem:[%s0 + $0x18] sm:$0xff]
  %v18 = vld [vmem:[%s0 + $0x20] sm:$0xff]
  %v19 = vld [vmem:[%s0 + $0x28] sm:$0xff]
  %v20 = vld [vmem:[%s0 + $0x30] sm:$0xff]
  %v21 = vld [vmem:[%s0 + $0x38] sm:$0xff]
  %v22 = vld [vmem:[%s0 + $0x40] sm:$0xff]
  %v23 = vld [vmem:[%s0 + $0x48] sm:$0xff]
  %v24 = vld [vmem:[%s0 + $0x50] sm:$0xff]
  %v25 = vld [vmem:[%s0 + $0x58] sm:$0xff]
  %v26 = vld [vmem:[%s0 + $0x60] sm:$0xff]
  %v27 = vld [vmem:[%s0 + $0x68] sm:$0xff]
  %v28 = vld [vmem:[%s0 + $0x70] sm:$0xff]
  %v29 = vld [vmem:[%s0 + $0x78] sm:$0xff]
  %v30 = vld [vmem:[%s0 + $0x80] sm:$0xff]
  %v31 = vld [vmem:[%s0 + $0x88] sm:$0xff]
  %v32 = vld [vmem:[%s0 + $0x90] sm:$0xff]
  %v33 = vld [vmem:[%s0 + $0x98] sm:$0xff]
  %v34 = vld [vmem:[%s0 + $0xa0] sm:$0xff]
  %v35 = vld [vmem:[%s0 + $0xa8] sm:$0xff]
  %v36 = vld [vmem:[%s0 + $0xb0] sm:$0xff]
  %v37 = vld [vmem:[%s0 + $0xb8] sm:$0xff]
  %v38 = vld [vmem:[%s0 + $0xc0] sm:$0xff]
  %v39 = vld [vmem:[%s0 + $0xc8] sm:$0xff]
  %v40 = vld [vmem:[%s0 + $0xd0] sm:$0xff]
  %v41 = vld [vmem:[%s0 + $0xd8] sm:$0xff]
  %v42 = vld [vmem:[%s0 + $0xe0] sm:$0xff]
  %v43 = vld [vmem:[%s0 + $0xe8] sm:$0xff]
  %v44 = vld [vmem:[%s0 + $0xf0] sm:$0xff]
  %v45 = vld [vmem:[%s0 + $0xf8] sm:$0xff]
  %v46 = vld [vmem:[%s1] sm:$0xff]
  %v47 = vld [vmem:[%s1 + $0x8] sm:$0xff]
  %v48 = vld [vmem:[%s1 + $0x10] sm:$0xff]
  %v49 = vld [vmem:[%s1 + $0x18] sm:$0xff]
  %v50 = vld [vmem:[%s1 + $0x20] sm:$0xff]
  %v51 = vld [vmem:[%s1 + $0x28] sm:$0xff]
  %v52 = vld [vmem:[%s1 + $0x30] sm:$0xff]
  %v53 = vld [vmem:[%s1 + $0x38] sm:$0xff]
  %v54 = vld [vmem:[%s1 + $0x40] sm:$0xff]
  %v55 = vld [vmem:[%s1 + $0x48] sm:$0xff]
  %v56 = vld [vmem:[%s1 + $0x50] sm:$0xff]
  %v57 = vld [vmem:[%s1 + $0x58] sm:$0xff]
  %v58 = vld [vmem:[%s1 + $0x60] sm:$0xff]
  %v59 = vld [vmem:[%s1 + $0x68] sm:$0xff]
  %v60 = vld [vmem:[%s1 + $0x70] sm:$0xff]
  %v61 = vld [vmem:[%s1 + $0x78] sm:$0xff]
  %v62 = vld [vmem:[%s1 + $0x80] sm:$0xff]
  %v63 = vld [vmem:[%s1 + $0x88] sm:$0xff]
  %v64 = vld [vmem:[%s1 + $0x90] sm:$0xff]
  %v65 = vld [vmem:[%s1 + $0x98] sm:$0xff]
  %v66 = vld [vmem:[%s1 + $0xa0] sm:$0xff]
  %v67 = vld [vmem:[%s1 + $0xa8] sm:$0xff]
  %v68 = vld [vmem:[%s1 + $0xb0] sm:$0xff]
  %v69 = vld [vmem:[%s1 + $0xb8] sm:$0xff]
  %v70 = vld [vmem:[%s1 + $0xc0] sm:$0xff]
  %v71 = vld [vmem:[%s1 + $0xc8] sm:$0xff]
  %v72 = vld [vmem:[%s1 + $0xd0] sm:$0xff]
  %v73 = vld [vmem:[%s1 + $0xd8] sm:$0xff]
  %v74 = vld [vmem:[%s1 + $0xe0] sm:$0xff]
  %v75 = vld [vmem:[%s1 + $0xe8] sm:$0xff]
  %v76 = vld [vmem:[%s1 + $0xf0] sm:$0xff]
  %v77 = vld [vmem:[%s1 + $0xf8] sm:$0xff]
  %v78 = vmul.f32 %v14, %v46
  %v79 = vmul.f32 %v15, %v47
  %v80 = vmul.f32 %v16, %v48
  %v81 = vmul.f32 %v17, %v49
  %v82 = vmul.f32 %v18, %v50
  %v83 = vmul.f32 %v19, %v51
  %v84 = vmul.f32 %v20, %v52
  %v85 = vmul.f32 %v21, %v53
  %v86 = vmul.f32 %v22, %v54
  %v87 = vmul.f32 %v23, %v55
  %v88 = vmul.f32 %v24, %v56
  %v89 = vmul.f32 %v25, %v57
  %v90 = vmul.f32 %v26, %v58
  %v91 = vmul.f32 %v27, %v59
  %v92 = vmul.f32 %v28, %v60
  %v93 = vmul.f32 %v29, %v61
  %v94 = vmul.f32 %v30, %v62
  %v95 = vmul.f32 %v31, %v63
  %v96 = vmul.f32 %v32, %v64
  %v97 = vmul.f32 %v33, %v65
  %v98 = vmul.f32 %v34, %v66
  %v99 = vmul.f32 %v35, %v67
  %v100 = vmul.f32 %v36, %v68
  %v101 = vmul.f32 %v37, %v69
  %v102 = vmul.f32 %v38, %v70
  %v103 = vmul.f32 %v39, %v71
  %v104 = vmul.f32 %v40, %v72
  %v105 = vmul.f32 %v41, %v73
  %v106 = vmul.f32 %v42, %v74
  %v107 = vmul.f32 %v43, %v75
  %v108 = vmul.f32 %v44, %v76
  %v109 = vmul.f32 %v45, %v77
  %v110 = vld [vmem:[%s2] sm:$0xff]
  %v111 = vld [vmem:[%s2 + $0x8] sm:$0xff]
  %v112 = vld [vmem:[%s2 + $0x10] sm:$0xff]
  %v113 = vld [vmem:[%s2 + $0x18] sm:$0xff]
  %v114 = vld [vmem:[%s2 + $0x20] sm:$0xff]
  %v115 = vld [vmem:[%s2 + $0x28] sm:$0xff]
  %v116 = vld [vmem:[%s2 + $0x30] sm:$0xff]
  %v117 = vld [vmem:[%s2 + $0x38] sm:$0xff]
  %v118 = vld [vmem:[%s2 + $0x40] sm:$0xff]
  %v119 = vld [vmem:[%s2 + $0x48] sm:$0xff]
  %v120 = vld [vmem:[%s2 + $0x50] sm:$0xff]
  %v121 = vld [vmem:[%s2 + $0x58] sm:$0xff]
  %v122 = vld [vmem:[%s2 + $0x60] sm:$0xff]
  %v123 = vld [vmem:[%s2 + $0x68] sm:$0xff]
  %v124 = vld [vmem:[%s2 + $0x70] sm:$0xff]
  %v125 = vld [vmem:[%s2 + $0x78] sm:$0xff]
  %v126 = vld [vmem:[%s2 + $0x80] sm:$0xff]
  %v127 = vld [vmem:[%s2 + $0x88] sm:$0xff]
  %v128 = vld [vmem:[%s2 + $0x90] sm:$0xff]
  %v129 = vld [vmem:[%s2 + $0x98] sm:$0xff]
  %v130 = vld [vmem:[%s2 + $0xa0] sm:$0xff]
  %v131 = vld [vmem:[%s2 + $0xa8] sm:$0xff]
  %v132 = vld [vmem:[%s2 + $0xb0] sm:$0xff]
  %v133 = vld [vmem:[%s2 + $0xb8] sm:$0xff]
  %v134 = vld [vmem:[%s2 + $0xc0] sm:$0xff]
  %v135 = vld [vmem:[%s2 + $0xc8] sm:$0xff]
  %v136 = vld [vmem:[%s2 + $0xd0] sm:$0xff]
  %v137 = vld [vmem:[%s2 + $0xd8] sm:$0xff]
  %v138 = vld [vmem:[%s2 + $0xe0] sm:$0xff]
  %v139 = vld [vmem:[%s2 + $0xe8] sm:$0xff]
  %v140 = vld [vmem:[%s2 + $0xf0] sm:$0xff]
  %v141 = vld [vmem:[%s2 + $0xf8] sm:$0xff]
  %v142 = vld [vmem:[%s2 + $0x100] sm:$0xff]
  %v143 = vld [vmem:[%s2 + $0x108] sm:$0xff]
  %v144 = vld [vmem:[%s2 + $0x110] sm:$0xff]
  %v145 = vld [vmem:[%s2 + $0x118] sm:$0xff]
  %v146 = vld [vmem:[%s2 + $0x120] sm:$0xff]
  %v147 = vld [vmem:[%s2 + $0x128] sm:$0xff]
  %v148 = vld [vmem:[%s2 + $0x130] sm:$0xff]
  %v149 = vld [vmem:[%s2 + $0x138] sm:$0xff]
  %v150 = vld [vmem:[%s2 + $0x140] sm:$0xff]
  %v151 = vld [vmem:[%s2 + $0x148] sm:$0xff]
  %v152 = vld [vmem:[%s2 + $0x150] sm:$0xff]
  %v153 = vld [vmem:[%s2 + $0x158] sm:$0xff]
  %v154 = vld [vmem:[%s2 + $0x160] sm:$0xff]
  %v155 = vld [vmem:[%s2 + $0x168] sm:$0xff]
  %v156 = vld [vmem:[%s2 + $0x170] sm:$0xff]
  %v157 = vld [vmem:[%s2 + $0x178] sm:$0xff]
  %v158 = vld [vmem:[%s2 + $0x180] sm:$0xff]
  %v159 = vld [vmem:[%s2 + $0x188] sm:$0xff]
  %v160 = vld [vmem:[%s2 + $0x190] sm:$0xff]
  %v161 = vld [vmem:[%s2 + $0x198] sm:$0xff]
  %v162 = vld [vmem:[%s2 + $0x1a0] sm:$0xff]
  %v163 = vld [vmem:[%s2 + $0x1a8] sm:$0xff]
  %v164 = vld [vmem:[%s2 + $0x1b0] sm:$0xff]
  %v165 = vld [vmem:[%s2 + $0x1b8] sm:$0xff]
  %v166 = vld [vmem:[%s2 + $0x1c0] sm:$0xff]
  %v167 = vld [vmem:[%s2 + $0x1c8] sm:$0xff]
  %v168 = vld [vmem:[%s2 + $0x1d0] sm:$0xff]
  %v169 = vld [vmem:[%s2 + $0x1d8] sm:$0xff]
  %v170 = vld [vmem:[%s2 + $0x1e0] sm:$0xff]
  %v171 = vld [vmem:[%s2 + $0x1e8] sm:$0xff]
  %v172 = vld [vmem:[%s2 + $0x1f0] sm:$0xff]
  %v173 = vld [vmem:[%s2 + $0x1f8] sm:$0xff]
  %v174 = vld [vmem:[%s2 + $0x200] sm:$0xff]
  %v175 = vld [vmem:[%s2 + $0x208] sm:$0xff]
  %v176 = vld [vmem:[%s2 + $0x210] sm:$0xff]
  %v177 = vld [vmem:[%s2 + $0x218] sm:$0xff]
  %v178 = vld [vmem:[%s2 + $0x220] sm:$0xff]
  %v179 = vld [vmem:[%s2 + $0x228] sm:$0xff]
  %v180 = vld [vmem:[%s2 + $0x230] sm:$0xff]
  %v181 = vld [vmem:[%s2 + $0x238] sm:$0xff]
  %v182 = vld [vmem:[%s2 + $0x240] sm:$0xff]
  %v183 = vld [vmem:[%s2 + $0x248] sm:$0xff]
  %v184 = vld [vmem:[%s2 + $0x250] sm:$0xff]
  %v185 = vld [vmem:[%s2 + $0x258] sm:$0xff]
  %v186 = vld [vmem:[%s2 + $0x260] sm:$0xff]
  %v187 = vld [vmem:[%s2 + $0x268] sm:$0xff]
  %v188 = vld [vmem:[%s2 + $0x270] sm:$0xff]
  %v189 = vld [vmem:[%s2 + $0x278] sm:$0xff]
  %v190 = vld [vmem:[%s2 + $0x280] sm:$0xff]
  %v191 = vld [vmem:[%s2 + $0x288] sm:$0xff]
  %v192 = vld [vmem:[%s2 + $0x290] sm:$0xff]
  %v193 = vld [vmem:[%s2 + $0x298] sm:$0xff]
  %v194 = vld [vmem:[%s2 + $0x2a0] sm:$0xff]
  %v195 = vld [vmem:[%s2 + $0x2a8] sm:$0xff]
  %v196 = vld [vmem:[%s2 + $0x2b0] sm:$0xff]
  %v197 = vld [vmem:[%s2 + $0x2b8] sm:$0xff]
  %v198 = vld [vmem:[%s2 + $0x2c0] sm:$0xff]
  %v199 = vld [vmem:[%s2 + $0x2c8] sm:$0xff]
  %v200 = vld [vmem:[%s2 + $0x2d0] sm:$0xff]
  %v201 = vld [vmem:[%s2 + $0x2d8] sm:$0xff]
  %v202 = vld [vmem:[%s2 + $0x2e0] sm:$0xff]
  %v203 = vld [vmem:[%s2 + $0x2e8] sm:$0xff]
  %v204 = vld [vmem:[%s2 + $0x2f0] sm:$0xff]
  %v205 = vld [vmem:[%s2 + $0x2f8] sm:$0xff]
  %v206 = vld [vmem:[%s2 + $0x300] sm:$0xff]
  %v207 = vld [vmem:[%s2 + $0x308] sm:$0xff]
  %v208 = vld [vmem:[%s2 + $0x310] sm:$0xff]
  %v209 = vld [vmem:[%s2 + $0x318] sm:$0xff]
  %v210 = vld [vmem:[%s2 + $0x320] sm:$0xff]
  %v211 = vld [vmem:[%s2 + $0x328] sm:$0xff]
  %v212 = vld [vmem:[%s2 + $0x330] sm:$0xff]
  %v213 = vld [vmem:[%s2 + $0x338] sm:$0xff]
  %v214 = vld [vmem:[%s2 + $0x340] sm:$0xff]
  %v215 = vld [vmem:[%s2 + $0x348] sm:$0xff]
  %v216 = vld [vmem:[%s2 + $0x350] sm:$0xff]
  %v217 = vld [vmem:[%s2 + $0x358] sm:$0xff]
  %v218 = vld [vmem:[%s2 + $0x360] sm:$0xff]
  %v219 = vld [vmem:[%s2 + $0x368] sm:$0xff]
  %v220 = vld [vmem:[%s2 + $0x370] sm:$0xff]
  %v221 = vld [vmem:[%s2 + $0x378] sm:$0xff]
  %v222 = vld [vmem:[%s2 + $0x380] sm:$0xff]
  %v223 = vld [vmem:[%s2 + $0x388] sm:$0xff]
  %v224 = vld [vmem:[%s2 + $0x390] sm:$0xff]
  %v225 = vld [vmem:[%s2 + $0x398] sm:$0xff]
  %v226 = vld [vmem:[%s2 + $0x3a0] sm:$0xff]
  %v227 = vld [vmem:[%s2 + $0x3a8] sm:$0xff]
  %v228 = vld [vmem:[%s2 + $0x3b0] sm:$0xff]
  %v229 = vld [vmem:[%s2 + $0x3b8] sm:$0xff]
  %v230 = vld [vmem:[%s2 + $0x3c0] sm:$0xff]
  %v231 = vld [vmem:[%s2 + $0x3c8] sm:$0xff]
  %v232 = vld [vmem:[%s2 + $0x3d0] sm:$0xff]
  %v233 = vld [vmem:[%s2 + $0x3d8] sm:$0xff]
  %v234 = vld [vmem:[%s2 + $0x3e0] sm:$0xff]
  %v235 = vld [vmem:[%s2 + $0x3e8] sm:$0xff]
  %v236 = vld [vmem:[%s2 + $0x3f0] sm:$0xff]
  %v237 = vld [vmem:[%s2 + $0x3f8] sm:$0xff]
  %v238 = vld [vmem:[%s2 + $0x400] sm:$0xff]
  %v239 = vld [vmem:[%s2 + $0x408] sm:$0xff]
  %v240 = vld [vmem:[%s2 + $0x410] sm:$0xff]
  %v241 = vld [vmem:[%s2 + $0x418] sm:$0xff]
  %v242 = vld [vmem:[%s2 + $0x420] sm:$0xff]
  %v243 = vld [vmem:[%s2 + $0x428] sm:$0xff]
  %v244 = vld [vmem:[%s2 + $0x430] sm:$0xff]
  %v245 = vld [vmem:[%s2 + $0x438] sm:$0xff]
  %v246 = vld [vmem:[%s2 + $0x440] sm:$0xff]
  %v247 = vld [vmem:[%s2 + $0x448] sm:$0xff]
  %v248 = vld [vmem:[%s2 + $0x450] sm:$0xff]
  %v249 = vld [vmem:[%s2 + $0x458] sm:$0xff]
  %v250 = vld [vmem:[%s2 + $0x460] sm:$0xff]
  %v251 = vld [vmem:[%s2 + $0x468] sm:$0xff]
  %v252 = vld [vmem:[%s2 + $0x470] sm:$0xff]
  %v253 = vld [vmem:[%s2 + $0x478] sm:$0xff]
  %v254 = vld [vmem:[%s2 + $0x480] sm:$0xff]
  %v255 = vld [vmem:[%s2 + $0x488] sm:$0xff]
  %v256 = vld [vmem:[%s2 + $0x490] sm:$0xff]
  %v257 = vld [vmem:[%s2 + $0x498] sm:$0xff]
  %v258 = vld [vmem:[%s2 + $0x4a0] sm:$0xff]
  %v259 = vld [vmem:[%s2 + $0x4a8] sm:$0xff]
  %v260 = vld [vmem:[%s2 + $0x4b0] sm:$0xff]
  %v261 = vld [vmem:[%s2 + $0x4b8] sm:$0xff]
  %v262 = vld [vmem:[%s2 + $0x4c0] sm:$0xff]
  %v263 = vld [vmem:[%s2 + $0x4c8] sm:$0xff]
  %v264 = vld [vmem:[%s2 + $0x4d0] sm:$0xff]
  %v265 = vld [vmem:[%s2 + $0x4d8] sm:$0xff]
  %v266 = vld [vmem:[%s2 + $0x4e0] sm:$0xff]
  %v267 = vld [vmem:[%s2 + $0x4e8] sm:$0xff]
  %v268 = vld [vmem:[%s2 + $0x4f0] sm:$0xff]
  %v269 = vld [vmem:[%s2 + $0x4f8] sm:$0xff]
  %v270 = vld [vmem:[%s2 + $0x500] sm:$0xff]
  %v271 = vld [vmem:[%s2 + $0x508] sm:$0xff]
  %v272 = vld [vmem:[%s2 + $0x510] sm:$0xff]
  %v273 = vld [vmem:[%s2 + $0x518] sm:$0xff]
  %v274 = vld [vmem:[%s2 + $0x520] sm:$0xff]
  %v275 = vld [vmem:[%s2 + $0x528] sm:$0xff]
  %v276 = vld [vmem:[%s2 + $0x530] sm:$0xff]
  %v277 = vld [vmem:[%s2 + $0x538] sm:$0xff]
  %v278 = vld [vmem:[%s2 + $0x540] sm:$0xff]
  %v279 = vld [vmem:[%s2 + $0x548] sm:$0xff]
  %v280 = vld [vmem:[%s2 + $0x550] sm:$0xff]
  %v281 = vld [vmem:[%s2 + $0x558] sm:$0xff]
  %v282 = vld [vmem:[%s2 + $0x560] sm:$0xff]
  %v283 = vld [vmem:[%s2 + $0x568] sm:$0xff]
  %v284 = vld [vmem:[%s2 + $0x570] sm:$0xff]
  %v285 = vld [vmem:[%s2 + $0x578] sm:$0xff]
  %v286 = vld [vmem:[%s2 + $0x580] sm:$0xff]
  %v287 = vld [vmem:[%s2 + $0x588] sm:$0xff]
  %v288 = vld [vmem:[%s2 + $0x590] sm:$0xff]
  %v289 = vld [vmem:[%s2 + $0x598] sm:$0xff]
  %v290 = vld [vmem:[%s2 + $0x5a0] sm:$0xff]
  %v291 = vld [vmem:[%s2 + $0x5a8] sm:$0xff]
  %v292 = vld [vmem:[%s2 + $0x5b0] sm:$0xff]
  %v293 = vld [vmem:[%s2 + $0x5b8] sm:$0xff]
  %v294 = vld [vmem:[%s2 + $0x5c0] sm:$0xff]
  %v295 = vld [vmem:[%s2 + $0x5c8] sm:$0xff]
  %v296 = vld [vmem:[%s2 + $0x5d0] sm:$0xff]
  %v297 = vld [vmem:[%s2 + $0x5d8] sm:$0xff]
  %v298 = vld [vmem:[%s2 + $0x5e0] sm:$0xff]
  %v299 = vld [vmem:[%s2 + $0x5e8] sm:$0xff]
  %v300 = vld [vmem:[%s2 + $0x5f0] sm:$0xff]
  %v301 = vld [vmem:[%s2 + $0x5f8] sm:$0xff]
  %v302 = vld [vmem:[%s2 + $0x600] sm:$0xff]
  %v303 = vld [vmem:[%s2 + $0x608] sm:$0xff]
  %v304 = vld [vmem:[%s2 + $0x610] sm:$0xff]
  %v305 = vld [vmem:[%s2 + $0x618] sm:$0xff]
  %v306 = vld [vmem:[%s2 + $0x620] sm:$0xff]
  %v307 = vld [vmem:[%s2 + $0x628] sm:$0xff]
  %v308 = vld [vmem:[%s2 + $0x630] sm:$0xff]
  %v309 = vld [vmem:[%s2 + $0x638] sm:$0xff]
  %v310 = vld [vmem:[%s2 + $0x640] sm:$0xff]
  %v311 = vld [vmem:[%s2 + $0x648] sm:$0xff]
  %v312 = vld [vmem:[%s2 + $0x650] sm:$0xff]
  %v313 = vld [vmem:[%s2 + $0x658] sm:$0xff]
  %v314 = vld [vmem:[%s2 + $0x660] sm:$0xff]
  %v315 = vld [vmem:[%s2 + $0x668] sm:$0xff]
  %v316 = vld [vmem:[%s2 + $0x670] sm:$0xff]
  %v317 = vld [vmem:[%s2 + $0x678] sm:$0xff]
  %v318 = vld [vmem:[%s2 + $0x680] sm:$0xff]
  %v319 = vld [vmem:[%s2 + $0x688] sm:$0xff]
  %v320 = vld [vmem:[%s2 + $0x690] sm:$0xff]
  %v321 = vld [vmem:[%s2 + $0x698] sm:$0xff]
  %v322 = vld [vmem:[%s2 + $0x6a0] sm:$0xff]
  %v323 = vld [vmem:[%s2 + $0x6a8] sm:$0xff]
  %v324 = vld [vmem:[%s2 + $0x6b0] sm:$0xff]
  %v325 = vld [vmem:[%s2 + $0x6b8] sm:$0xff]
  %v326 = vld [vmem:[%s2 + $0x6c0] sm:$0xff]
  %v327 = vld [vmem:[%s2 + $0x6c8] sm:$0xff]
  %v328 = vld [vmem:[%s2 + $0x6d0] sm:$0xff]
  %v329 = vld [vmem:[%s2 + $0x6d8] sm:$0xff]
  %v330 = vld [vmem:[%s2 + $0x6e0] sm:$0xff]
  %v331 = vld [vmem:[%s2 + $0x6e8] sm:$0xff]
  %v332 = vld [vmem:[%s2 + $0x6f0] sm:$0xff]
  %v333 = vld [vmem:[%s2 + $0x6f8] sm:$0xff]
  %v334 = vld [vmem:[%s2 + $0x700] sm:$0xff]
  %v335 = vld [vmem:[%s2 + $0x708] sm:$0xff]
  %v336 = vld [vmem:[%s2 + $0x710] sm:$0xff]
  %v337 = vld [vmem:[%s2 + $0x718] sm:$0xff]
  %v338 = vld [vmem:[%s2 + $0x720] sm:$0xff]
  %v339 = vld [vmem:[%s2 + $0x728] sm:$0xff]
  %v340 = vld [vmem:[%s2 + $0x730] sm:$0xff]
  %v341 = vld [vmem:[%s2 + $0x738] sm:$0xff]
  %v342 = vld [vmem:[%s2 + $0x740] sm:$0xff]
  %v343 = vld [vmem:[%s2 + $0x748] sm:$0xff]
  %v344 = vld [vmem:[%s2 + $0x750] sm:$0xff]
  %v345 = vld [vmem:[%s2 + $0x758] sm:$0xff]
  %v346 = vld [vmem:[%s2 + $0x760] sm:$0xff]
  %v347 = vld [vmem:[%s2 + $0x768] sm:$0xff]
  %v348 = vld [vmem:[%s2 + $0x770] sm:$0xff]
  %v349 = vld [vmem:[%s2 + $0x778] sm:$0xff]
  %v350 = vld [vmem:[%s2 + $0x780] sm:$0xff]
  %v351 = vld [vmem:[%s2 + $0x788] sm:$0xff]
  %v352 = vld [vmem:[%s2 + $0x790] sm:$0xff]
  %v353 = vld [vmem:[%s2 + $0x798] sm:$0xff]
  %v354 = vld [vmem:[%s2 + $0x7a0] sm:$0xff]
  %v355 = vld [vmem:[%s2 + $0x7a8] sm:$0xff]
  %v356 = vld [vmem:[%s2 + $0x7b0] sm:$0xff]
  %v357 = vld [vmem:[%s2 + $0x7b8] sm:$0xff]
  %v358 = vld [vmem:[%s2 + $0x7c0] sm:$0xff]
  %v359 = vld [vmem:[%s2 + $0x7c8] sm:$0xff]
  %v360 = vld [vmem:[%s2 + $0x7d0] sm:$0xff]
  %v361 = vld [vmem:[%s2 + $0x7d8] sm:$0xff]
  %v362 = vld [vmem:[%s2 + $0x7e0] sm:$0xff]
  %v363 = vld [vmem:[%s2 + $0x7e8] sm:$0xff]
  %v364 = vld [vmem:[%s2 + $0x7f0] sm:$0xff]
  %v365 = vld [vmem:[%s2 + $0x7f8] sm:$0xff]
  %v366 = vld [vmem:[%s2 + $0x800] sm:$0xff]
  %v367 = vld [vmem:[%s2 + $0x808] sm:$0xff]
  %v368 = vld [vmem:[%s2 + $0x810] sm:$0xff]
  %v369 = vld [vmem:[%s2 + $0x818] sm:$0xff]
  %v370 = vld [vmem:[%s2 + $0x820] sm:$0xff]
  %v371 = vld [vmem:[%s2 + $0x828] sm:$0xff]
  %v372 = vld [vmem:[%s2 + $0x830] sm:$0xff]
  %v373 = vld [vmem:[%s2 + $0x838] sm:$0xff]
  %v374 = vld [vmem:[%s2 + $0x840] sm:$0xff]
  %v375 = vld [vmem:[%s2 + $0x848] sm:$0xff]
  %v376 = vld [vmem:[%s2 + $0x850] sm:$0xff]
  %v377 = vld [vmem:[%s2 + $0x858] sm:$0xff]
  %v378 = vld [vmem:[%s2 + $0x860] sm:$0xff]
  %v379 = vld [vmem:[%s2 + $0x868] sm:$0xff]
  %v380 = vld [vmem:[%s2 + $0x870] sm:$0xff]
  %v381 = vld [vmem:[%s2 + $0x878] sm:$0xff]
  %v382 = vld [vmem:[%s2 + $0x880] sm:$0xff]
  %v383 = vld [vmem:[%s2 + $0x888] sm:$0xff]
  %v384 = vld [vmem:[%s2 + $0x890] sm:$0xff]
  %v385 = vld [vmem:[%s2 + $0x898] sm:$0xff]
  %v386 = vld [vmem:[%s2 + $0x8a0] sm:$0xff]
  %v387 = vld [vmem:[%s2 + $0x8a8] sm:$0xff]
  %v388 = vld [vmem:[%s2 + $0x8b0] sm:$0xff]
  %v389 = vld [vmem:[%s2 + $0x8b8] sm:$0xff]
  %v390 = vld [vmem:[%s2 + $0x8c0] sm:$0xff]
  %v391 = vld [vmem:[%s2 + $0x8c8] sm:$0xff]
  %v392 = vld [vmem:[%s2 + $0x8d0] sm:$0xff]
  %v393 = vld [vmem:[%s2 + $0x8d8] sm:$0xff]
  %v394 = vld [vmem:[%s2 + $0x8e0] sm:$0xff]
  %v395 = vld [vmem:[%s2 + $0x8e8] sm:$0xff]
  %v396 = vld [vmem:[%s2 + $0x8f0] sm:$0xff]
  %v397 = vld [vmem:[%s2 + $0x8f8] sm:$0xff]
  %v398 = vld [vmem:[%s2 + $0x900] sm:$0xff]
  %v399 = vld [vmem:[%s2 + $0x908] sm:$0xff]
  %v400 = vld [vmem:[%s2 + $0x910] sm:$0xff]
  %v401 = vld [vmem:[%s2 + $0x918] sm:$0xff]
  %v402 = vld [vmem:[%s2 + $0x920] sm:$0xff]
  %v403 = vld [vmem:[%s2 + $0x928] sm:$0xff]
  %v404 = vld [vmem:[%s2 + $0x930] sm:$0xff]
  %v405 = vld [vmem:[%s2 + $0x938] sm:$0xff]
  %v406 = vld [vmem:[%s2 + $0x940] sm:$0xff]
  %v407 = vld [vmem:[%s2 + $0x948] sm:$0xff]
  %v408 = vld [vmem:[%s2 + $0x950] sm:$0xff]
  %v409 = vld [vmem:[%s2 + $0x958] sm:$0xff]
  %v410 = vld [vmem:[%s2 + $0x960] sm:$0xff]
  %v411 = vld [vmem:[%s2 + $0x968] sm:$0xff]
  %v412 = vld [vmem:[%s2 + $0x970] sm:$0xff]
  %v413 = vld [vmem:[%s2 + $0x978] sm:$0xff]
  %v414 = vld [vmem:[%s2 + $0x980] sm:$0xff]
  %v415 = vld [vmem:[%s2 + $0x988] sm:$0xff]
  %v416 = vld [vmem:[%s2 + $0x990] sm:$0xff]
  %v417 = vld [vmem:[%s2 + $0x998] sm:$0xff]
  %v418 = vld [vmem:[%s2 + $0x9a0] sm:$0xff]
  %v419 = vld [vmem:[%s2 + $0x9a8] sm:$0xff]
  %v420 = vld [vmem:[%s2 + $0x9b0] sm:$0xff]
  %v421 = vld [vmem:[%s2 + $0x9b8] sm:$0xff]
  %v422 = vld [vmem:[%s2 + $0x9c0] sm:$0xff]
  %v423 = vld [vmem:[%s2 + $0x9c8] sm:$0xff]
  %v424 = vld [vmem:[%s2 + $0x9d0] sm:$0xff]
  %v425 = vld [vmem:[%s2 + $0x9d8] sm:$0xff]
  %v426 = vld [vmem:[%s2 + $0x9e0] sm:$0xff]
  %v427 = vld [vmem:[%s2 + $0x9e8] sm:$0xff]
  %v428 = vld [vmem:[%s2 + $0x9f0] sm:$0xff]
  %v429 = vld [vmem:[%s2 + $0x9f8] sm:$0xff]
  %v430 = vld [vmem:[%s2 + $0xa00] sm:$0xff]
  %v431 = vld [vmem:[%s2 + $0xa08] sm:$0xff]
  %v432 = vld [vmem:[%s2 + $0xa10] sm:$0xff]
  %v433 = vld [vmem:[%s2 + $0xa18] sm:$0xff]
  %v434 = vld [vmem:[%s2 + $0xa20] sm:$0xff]
  %v435 = vld [vmem:[%s2 + $0xa28] sm:$0xff]
  %v436 = vld [vmem:[%s2 + $0xa30] sm:$0xff]
  %v437 = vld [vmem:[%s2 + $0xa38] sm:$0xff]
  %v438 = vld [vmem:[%s2 + $0xa40] sm:$0xff]
  %v439 = vld [vmem:[%s2 + $0xa48] sm:$0xff]
  %v440 = vld [vmem:[%s2 + $0xa50] sm:$0xff]
  %v441 = vld [vmem:[%s2 + $0xa58] sm:$0xff]
  %v442 = vld [vmem:[%s2 + $0xa60] sm:$0xff]
  %v443 = vld [vmem:[%s2 + $0xa68] sm:$0xff]
  %v444 = vld [vmem:[%s2 + $0xa70] sm:$0xff]
  %v445 = vld [vmem:[%s2 + $0xa78] sm:$0xff]
  %v446 = vld [vmem:[%s2 + $0xa80] sm:$0xff]
  %v447 = vld [vmem:[%s2 + $0xa88] sm:$0xff]
  %v448 = vld [vmem:[%s2 + $0xa90] sm:$0xff]
  %v449 = vld [vmem:[%s2 + $0xa98] sm:$0xff]
  %v450 = vld [vmem:[%s2 + $0xaa0] sm:$0xff]
  %v451 = vld [vmem:[%s2 + $0xaa8] sm:$0xff]
  %v452 = vld [vmem:[%s2 + $0xab0] sm:$0xff]
  %v453 = vld [vmem:[%s2 + $0xab8] sm:$0xff]
  %v454 = vld [vmem:[%s2 + $0xac0] sm:$0xff]
  %v455 = vld [vmem:[%s2 + $0xac8] sm:$0xff]
  %v456 = vld [vmem:[%s2 + $0xad0] sm:$0xff]
  %v457 = vld [vmem:[%s2 + $0xad8] sm:$0xff]
  %v458 = vld [vmem:[%s2 + $0xae0] sm:$0xff]
  %v459 = vld [vmem:[%s2 + $0xae8] sm:$0xff]
  %v460 = vld [vmem:[%s2 + $0xaf0] sm:$0xff]
  %v461 = vld [vmem:[%s2 + $0xaf8] sm:$0xff]
  %v462 = vld [vmem:[%s2 + $0xb00] sm:$0xff]
  %v463 = vld [vmem:[%s2 + $0xb08] sm:$0xff]
  %v464 = vld [vmem:[%s2 + $0xb10] sm:$0xff]
  %v465 = vld [vmem:[%s2 + $0xb18] sm:$0xff]
  %v466 = vld [vmem:[%s2 + $0xb20] sm:$0xff]
  %v467 = vld [vmem:[%s2 + $0xb28] sm:$0xff]
  %v468 = vld [vmem:[%s2 + $0xb30] sm:$0xff]
  %v469 = vld [vmem:[%s2 + $0xb38] sm:$0xff]
  %v470 = vld [vmem:[%s2 + $0xb40] sm:$0xff]
  %v471 = vld [vmem:[%s2 + $0xb48] sm:$0xff]
  %v472 = vld [vmem:[%s2 + $0xb50] sm:$0xff]
  %v473 = vld [vmem:[%s2 + $0xb58] sm:$0xff]
  %v474 = vld [vmem:[%s2 + $0xb60] sm:$0xff]
  %v475 = vld [vmem:[%s2 + $0xb68] sm:$0xff]
  %v476 = vld [vmem:[%s2 + $0xb70] sm:$0xff]
  %v477 = vld [vmem:[%s2 + $0xb78] sm:$0xff]
  %v478 = vld [vmem:[%s2 + $0xb80] sm:$0xff]
  %v479 = vld [vmem:[%s2 + $0xb88] sm:$0xff]
  %v480 = vld [vmem:[%s2 + $0xb90] sm:$0xff]
  %v481 = vld [vmem:[%s2 + $0xb98] sm:$0xff]
  %v482 = vld [vmem:[%s2 + $0xba0] sm:$0xff]
  %v483 = vld [vmem:[%s2 + $0xba8] sm:$0xff]
  %v484 = vld [vmem:[%s2 + $0xbb0] sm:$0xff]
  %v485 = vld [vmem:[%s2 + $0xbb8] sm:$0xff]
  %v486 = vld [vmem:[%s2 + $0xbc0] sm:$0xff]
  %v487 = vld [vmem:[%s2 + $0xbc8] sm:$0xff]
  %v488 = vld [vmem:[%s2 + $0xbd0] sm:$0xff]
  %v489 = vld [vmem:[%s2 + $0xbd8] sm:$0xff]
  %v490 = vld [vmem:[%s2 + $0xbe0] sm:$0xff]
  %v491 = vld [vmem:[%s2 + $0xbe8] sm:$0xff]
  %v492 = vld [vmem:[%s2 + $0xbf0] sm:$0xff]
  %v493 = vld [vmem:[%s2 + $0xbf8] sm:$0xff]
  %v494 = vld [vmem:[%s2 + $0xc00] sm:$0xff]
  %v495 = vld [vmem:[%s2 + $0xc08] sm:$0xff]
  %v496 = vld [vmem:[%s2 + $0xc10] sm:$0xff]
  %v497 = vld [vmem:[%s2 + $0xc18] sm:$0xff]
  %v498 = vld [vmem:[%s2 + $0xc20] sm:$0xff]
  %v499 = vld [vmem:[%s2 + $0xc28] sm:$0xff]
  %v500 = vld [vmem:[%s2 + $0xc30] sm:$0xff]
  %v501 = vld [vmem:[%s2 + $0xc38] sm:$0xff]
  %v502 = vld [vmem:[%s2 + $0xc40] sm:$0xff]
  %v503 = vld [vmem:[%s2 + $0xc48] sm:$0xff]
  %v504 = vld [vmem:[%s2 + $0xc50] sm:$0xff]
  %v505 = vld [vmem:[%s2 + $0xc58] sm:$0xff]
  %v506 = vld [vmem:[%s2 + $0xc60] sm:$0xff]
  %v507 = vld [vmem:[%s2 + $0xc68] sm:$0xff]
  %v508 = vld [vmem:[%s2 + $0xc70] sm:$0xff]
  %v509 = vld [vmem:[%s2 + $0xc78] sm:$0xff]
  %v510 = vld [vmem:[%s2 + $0xc80] sm:$0xff]
  %v511 = vld [vmem:[%s2 + $0xc88] sm:$0xff]
  %v512 = vld [vmem:[%s2 + $0xc90] sm:$0xff]
  %v513 = vld [vmem:[%s2 + $0xc98] sm:$0xff]
  %v514 = vld [vmem:[%s2 + $0xca0] sm:$0xff]
  %v515 = vld [vmem:[%s2 + $0xca8] sm:$0xff]
  %v516 = vld [vmem:[%s2 + $0xcb0] sm:$0xff]
  %v517 = vld [vmem:[%s2 + $0xcb8] sm:$0xff]
  %v518 = vld [vmem:[%s2 + $0xcc0] sm:$0xff]
  %v519 = vld [vmem:[%s2 + $0xcc8] sm:$0xff]
  %v520 = vld [vmem:[%s2 + $0xcd0] sm:$0xff]
  %v521 = vld [vmem:[%s2 + $0xcd8] sm:$0xff]
  %v522 = vld [vmem:[%s2 + $0xce0] sm:$0xff]
  %v523 = vld [vmem:[%s2 + $0xce8] sm:$0xff]
  %v524 = vld [vmem:[%s2 + $0xcf0] sm:$0xff]
  %v525 = vld [vmem:[%s2 + $0xcf8] sm:$0xff]
  %v526 = vld [vmem:[%s2 + $0xd00] sm:$0xff]
  %v527 = vld [vmem:[%s2 + $0xd08] sm:$0xff]
  %v528 = vld [vmem:[%s2 + $0xd10] sm:$0xff]
  %v529 = vld [vmem:[%s2 + $0xd18] sm:$0xff]
  %v530 = vld [vmem:[%s2 + $0xd20] sm:$0xff]
  %v531 = vld [vmem:[%s2 + $0xd28] sm:$0xff]
  %v532 = vld [vmem:[%s2 + $0xd30] sm:$0xff]
  %v533 = vld [vmem:[%s2 + $0xd38] sm:$0xff]
  %v534 = vld [vmem:[%s2 + $0xd40] sm:$0xff]
  %v535 = vld [vmem:[%s2 + $0xd48] sm:$0xff]
  %v536 = vld [vmem:[%s2 + $0xd50] sm:$0xff]
  %v537 = vld [vmem:[%s2 + $0xd58] sm:$0xff]
  %v538 = vld [vmem:[%s2 + $0xd60] sm:$0xff]
  %v539 = vld [vmem:[%s2 + $0xd68] sm:$0xff]
  %v540 = vld [vmem:[%s2 + $0xd70] sm:$0xff]
  %v541 = vld [vmem:[%s2 + $0xd78] sm:$0xff]
  %v542 = vld [vmem:[%s2 + $0xd80] sm:$0xff]
  %v543 = vld [vmem:[%s2 + $0xd88] sm:$0xff]
  %v544 = vld [vmem:[%s2 + $0xd90] sm:$0xff]
  %v545 = vld [vmem:[%s2 + $0xd98] sm:$0xff]
  %v546 = vld [vmem:[%s2 + $0xda0] sm:$0xff]
  %v547 = vld [vmem:[%s2 + $0xda8] sm:$0xff]
  %v548 = vld [vmem:[%s2 + $0xdb0] sm:$0xff]
  %v549 = vld [vmem:[%s2 + $0xdb8] sm:$0xff]
  %v550 = vld [vmem:[%s2 + $0xdc0] sm:$0xff]
  %v551 = vld [vmem:[%s2 + $0xdc8] sm:$0xff]
  %v552 = vld [vmem:[%s2 + $0xdd0] sm:$0xff]
  %v553 = vld [vmem:[%s2 + $0xdd8] sm:$0xff]
  %v554 = vld [vmem:[%s2 + $0xde0] sm:$0xff]
  %v555 = vld [vmem:[%s2 + $0xde8] sm:$0xff]
  %v556 = vld [vmem:[%s2 + $0xdf0] sm:$0xff]
  %v557 = vld [vmem:[%s2 + $0xdf8] sm:$0xff]
  %v558 = vld [vmem:[%s2 + $0xe00] sm:$0xff]
  %v559 = vld [vmem:[%s2 + $0xe08] sm:$0xff]
  %v560 = vld [vmem:[%s2 + $0xe10] sm:$0xff]
  %v561 = vld [vmem:[%s2 + $0xe18] sm:$0xff]
  %v562 = vld [vmem:[%s2 + $0xe20] sm:$0xff]
  %v563 = vld [vmem:[%s2 + $0xe28] sm:$0xff]
  %v564 = vld [vmem:[%s2 + $0xe30] sm:$0xff]
  %v565 = vld [vmem:[%s2 + $0xe38] sm:$0xff]
  %v566 = vld [vmem:[%s2 + $0xe40] sm:$0xff]
  %v567 = vld [vmem:[%s2 + $0xe48] sm:$0xff]
  %v568 = vld [vmem:[%s2 + $0xe50] sm:$0xff]
  %v569 = vld [vmem:[%s2 + $0xe58] sm:$0xff]
  %v570 = vld [vmem:[%s2 + $0xe60] sm:$0xff]
  %v571 = vld [vmem:[%s2 + $0xe68] sm:$0xff]
  %v572 = vld [vmem:[%s2 + $0xe70] sm:$0xff]
  %v573 = vld [vmem:[%s2 + $0xe78] sm:$0xff]
  %v574 = vld [vmem:[%s2 + $0xe80] sm:$0xff]
  %v575 = vld [vmem:[%s2 + $0xe88] sm:$0xff]
  %v576 = vld [vmem:[%s2 + $0xe90] sm:$0xff]
  %v577 = vld [vmem:[%s2 + $0xe98] sm:$0xff]
  %v578 = vld [vmem:[%s2 + $0xea0] sm:$0xff]
  %v579 = vld [vmem:[%s2 + $0xea8] sm:$0xff]
  %v580 = vld [vmem:[%s2 + $0xeb0] sm:$0xff]
  %v581 = vld [vmem:[%s2 + $0xeb8] sm:$0xff]
  %v582 = vld [vmem:[%s2 + $0xec0] sm:$0xff]
  %v583 = vld [vmem:[%s2 + $0xec8] sm:$0xff]
  %v584 = vld [vmem:[%s2 + $0xed0] sm:$0xff]
  %v585 = vld [vmem:[%s2 + $0xed8] sm:$0xff]
  %v586 = vld [vmem:[%s2 + $0xee0] sm:$0xff]
  %v587 = vld [vmem:[%s2 + $0xee8] sm:$0xff]
  %v588 = vld [vmem:[%s2 + $0xef0] sm:$0xff]
  %v589 = vld [vmem:[%s2 + $0xef8] sm:$0xff]
  %v590 = vld [vmem:[%s2 + $0xf00] sm:$0xff]
  %v591 = vld [vmem:[%s2 + $0xf08] sm:$0xff]
  %v592 = vld [vmem:[%s2 + $0xf10] sm:$0xff]
  %v593 = vld [vmem:[%s2 + $0xf18] sm:$0xff]
  %v594 = vld [vmem:[%s2 + $0xf20] sm:$0xff]
  %v595 = vld [vmem:[%s2 + $0xf28] sm:$0xff]
  %v596 = vld [vmem:[%s2 + $0xf30] sm:$0xff]
  %v597 = vld [vmem:[%s2 + $0xf38] sm:$0xff]
  %v598 = vld [vmem:[%s2 + $0xf40] sm:$0xff]
  %v599 = vld [vmem:[%s2 + $0xf48] sm:$0xff]
  %v600 = vld [vmem:[%s2 + $0xf50] sm:$0xff]
  %v601 = vld [vmem:[%s2 + $0xf58] sm:$0xff]
  %v602 = vld [vmem:[%s2 + $0xf60] sm:$0xff]
  %v603 = vld [vmem:[%s2 + $0xf68] sm:$0xff]
  %v604 = vld [vmem:[%s2 + $0xf70] sm:$0xff]
  %v605 = vld [vmem:[%s2 + $0xf78] sm:$0xff]
  %v606 = vld [vmem:[%s2 + $0xf80] sm:$0xff]
  %v607 = vld [vmem:[%s2 + $0xf88] sm:$0xff]
  %v608 = vld [vmem:[%s2 + $0xf90] sm:$0xff]
  %v609 = vld [vmem:[%s2 + $0xf98] sm:$0xff]
  %v610 = vld [vmem:[%s2 + $0xfa0] sm:$0xff]
  %v611 = vld [vmem:[%s2 + $0xfa8] sm:$0xff]
  %v612 = vld [vmem:[%s2 + $0xfb0] sm:$0xff]
  %v613 = vld [vmem:[%s2 + $0xfb8] sm:$0xff]
  %v614 = vld [vmem:[%s2 + $0xfc0] sm:$0xff]
  %v615 = vld [vmem:[%s2 + $0xfc8] sm:$0xff]
  %v616 = vld [vmem:[%s2 + $0xfd0] sm:$0xff]
  %v617 = vld [vmem:[%s2 + $0xfd8] sm:$0xff]
  %v618 = vld [vmem:[%s2 + $0xfe0] sm:$0xff]
  %v619 = vld [vmem:[%s2 + $0xfe8] sm:$0xff]
  %v620 = vld [vmem:[%s2 + $0xff0] sm:$0xff]
  %v621 = vld [vmem:[%s2 + $0xff8] sm:$0xff]
  %622 = vmatprep.subr.mxu0 0.0
  %623 = vmatpush1.msra.mxu0 %v110
  %624 = vmatprep.subr.mxu0 0.0
  %625 = vmatpush1.msra.mxu0 %v111
  %626 = vmatprep.subr.mxu0 0.0
  %627 = vmatpush1.msra.mxu0 %v112
  %628 = vmatprep.subr.mxu0 0.0
  %629 = vmatpush1.msra.mxu0 %v113
  %630 = vmatprep.subr.mxu0 0.0
  %631 = vmatpush1.msra.mxu0 %v114
  %632 = vmatprep.subr.mxu0 0.0
  %633 = vmatpush1.msra.mxu0 %v115
  %634 = vmatprep.subr.mxu0 0.0
  %635 = vmatpush1.msra.mxu0 %v116
  %636 = vmatprep.subr.mxu0 0.0
  %637 = vmatpush1.msra.mxu0 %v117
  %638 = vmatprep.subr.mxu0 0.0
  %639 = vmatpush1.msra.mxu0 %v118
  %640 = vmatprep.subr.mxu0 0.0
  %641 = vmatpush1.msra.mxu0 %v119
  %642 = vmatprep.subr.mxu0 0.0
  %643 = vmatpush1.msra.mxu0 %v120
  %644 = vmatprep.subr.mxu0 0.0
  %645 = vmatpush1.msra.mxu0 %v121
  %646 = vmatprep.subr.mxu0 0.0
  %647 = vmatpush1.msra.mxu0 %v122
  %648 = vmatprep.subr.mxu0 0.0
  %649 = vmatpush1.msra.mxu0 %v123
  %650 = vmatprep.subr.mxu0 0.0
  %651 = vmatpush1.msra.mxu0 %v124
  %652 = vmatprep.subr.mxu0 0.0
  %653 = vmatpush1.msra.mxu0 %v125
  %654 = vmatprep.subr.mxu0 0.0
  %655 = vmatpush1.msra.mxu0 %v126
  %656 = vmatprep.subr.mxu0 0.0
  %657 = vmatpush1.msra.mxu0 %v127
  %658 = vmatprep.subr.mxu0 0.0
  %659 = vmatpush1.msra.mxu0 %v128
  %660 = vmatprep.subr.mxu0 0.0
  %661 = vmatpush1.msra.mxu0 %v129
  %662 = vmatprep.subr.mxu0 0.0
  %663 = vmatpush1.msra.mxu0 %v130
  %664 = vmatprep.subr.mxu0 0.0
  %665 = vmatpush1.msra.mxu0 %v131
  %666 = vmatprep.subr.mxu0 0.0
  %667 = vmatpush1.msra.mxu0 %v132
  %668 = vmatprep.subr.mxu0 0.0
  %669 = vmatpush1.msra.mxu0 %v133
  %670 = vmatprep.subr.mxu0 0.0
  %671 = vmatpush1.msra.mxu0 %v134
  %672 = vmatprep.subr.mxu0 0.0
  %673 = vmatpush1.msra.mxu0 %v135
  %674 = vmatprep.subr.mxu0 0.0
  %675 = vmatpush1.msra.mxu0 %v136
  %676 = vmatprep.subr.mxu0 0.0
  %677 = vmatpush1.msra.mxu0 %v137
  %678 = vmatprep.subr.mxu0 0.0
  %679 = vmatpush1.msra.mxu0 %v138
  %680 = vmatprep.subr.mxu0 0.0
  %681 = vmatpush1.msra.mxu0 %v139
  %682 = vmatprep.subr.mxu0 0.0
  %683 = vmatpush1.msra.mxu0 %v140
  %684 = vmatprep.subr.mxu0 0.0
  %685 = vmatpush1.msra.mxu0 %v141
  %686 = vmatprep.mubr.f32.mxu0 %v79
  %687 = vmatmul.mubr.f32.gmra.mrb[0].mxu0 %v78
  %v688 = vpop.f32.mrb[0].mxu0
  %v689 = vadd.f32 0.0, %v688
  %v690 = vpop.f32.mrb[0].mxu0
  %691 = vdwg.mxu0
  %692 = vmatprep.subr.mxu0 0.0
  %693 = vmatpush1.msra.mxu0 %v142
  %694 = vmatprep.subr.mxu0 0.0
  %695 = vmatpush1.msra.mxu0 %v143
  %696 = vmatprep.subr.mxu0 0.0
  %697 = vmatpush1.msra.mxu0 %v144
  %698 = vmatprep.subr.mxu0 0.0
  %699 = vmatpush1.msra.mxu0 %v145
  %700 = vmatprep.subr.mxu0 0.0
  %701 = vmatpush1.msra.mxu0 %v146
  %702 = vmatprep.subr.mxu0 0.0
  %703 = vmatpush1.msra.mxu0 %v147
  %704 = vmatprep.subr.mxu0 0.0
  %705 = vmatpush1.msra.mxu0 %v148
  %706 = vmatprep.subr.mxu0 0.0
  %707 = vmatpush1.msra.mxu0 %v149
  %708 = vmatprep.subr.mxu0 0.0
  %709 = vmatpush1.msra.mxu0 %v150
  %710 = vmatprep.subr.mxu0 0.0
  %711 = vmatpush1.msra.mxu0 %v151
  %712 = vmatprep.subr.mxu0 0.0
  %713 = vmatpush1.msra.mxu0 %v152
  %714 = vmatprep.subr.mxu0 0.0
  %715 = vmatpush1.msra.mxu0 %v153
  %716 = vmatprep.subr.mxu0 0.0
  %717 = vmatpush1.msra.mxu0 %v154
  %718 = vmatprep.subr.mxu0 0.0
  %719 = vmatpush1.msra.mxu0 %v155
  %720 = vmatprep.subr.mxu0 0.0
  %721 = vmatpush1.msra.mxu0 %v156
  %722 = vmatprep.subr.mxu0 0.0
  %723 = vmatpush1.msra.mxu0 %v157
  %724 = vmatprep.subr.mxu0 0.0
  %725 = vmatpush1.msra.mxu0 %v158
  %726 = vmatprep.subr.mxu0 0.0
  %727 = vmatpush1.msra.mxu0 %v159
  %728 = vmatprep.subr.mxu0 0.0
  %729 = vmatpush1.msra.mxu0 %v160
  %730 = vmatprep.subr.mxu0 0.0
  %731 = vmatpush1.msra.mxu0 %v161
  %732 = vmatprep.subr.mxu0 0.0
  %733 = vmatpush1.msra.mxu0 %v162
  %734 = vmatprep.subr.mxu0 0.0
  %735 = vmatpush1.msra.mxu0 %v163
  %736 = vmatprep.subr.mxu0 0.0
  %737 = vmatpush1.msra.mxu0 %v164
  %738 = vmatprep.subr.mxu0 0.0
  %739 = vmatpush1.msra.mxu0 %v165
  %740 = vmatprep.subr.mxu0 0.0
  %741 = vmatpush1.msra.mxu0 %v166
  %742 = vmatprep.subr.mxu0 0.0
  %743 = vmatpush1.msra.mxu0 %v167
  %744 = vmatprep.subr.mxu0 0.0
  %745 = vmatpush1.msra.mxu0 %v168
  %746 = vmatprep.subr.mxu0 0.0
  %747 = vmatpush1.msra.mxu0 %v169
  %748 = vmatprep.subr.mxu0 0.0
  %749 = vmatpush1.msra.mxu0 %v170
  %750 = vmatprep.subr.mxu0 0.0
  %751 = vmatpush1.msra.mxu0 %v171
  %752 = vmatprep.subr.mxu0 0.0
  %753 = vmatpush1.msra.mxu0 %v172
  %754 = vmatprep.subr.mxu0 0.0
  %755 = vmatpush1.msra.mxu0 %v173
  %756 = vmatprep.mubr.f32.mxu0 %v81
  %757 = vmatmul.mubr.f32.gmra.mrb[0].mxu0 %v80
  %v758 = vpop.f32.mrb[0].mxu0
  %v759 = vadd.f32 %v689, %v758
  %v760 = vpop.f32.mrb[0].mxu0
  %761 = vdwg.mxu0
  %762 = vmatprep.subr.mxu0 0.0
  %763 = vmatpush1.msra.mxu0 %v174
  %764 = vmatprep.subr.mxu0 0.0
  %765 = vmatpush1.msra.mxu0 %v175
  %766 = vmatprep.subr.mxu0 0.0
  %767 = vmatpush1.msra.mxu0 %v176
  %768 = vmatprep.subr.mxu0 0.0
  %769 = vmatpush1.msra.mxu0 %v177
  %770 = vmatprep.subr.mxu0 0.0
  %771 = vmatpush1.msra.mxu0 %v178
  %772 = vmatprep.subr.mxu0 0.0
  %773 = vmatpush1.msra.mxu0 %v179
  %774 = vmatprep.subr.mxu0 0.0
  %775 = vmatpush1.msra.mxu0 %v180
  %776 = vmatprep.subr.mxu0 0.0
  %777 = vmatpush1.msra.mxu0 %v181
  %778 = vmatprep.subr.mxu0 0.0
  %779 = vmatpush1.msra.mxu0 %v182
  %780 = vmatprep.subr.mxu0 0.0
  %781 = vmatpush1.msra.mxu0 %v183
  %782 = vmatprep.subr.mxu0 0.0
  %783 = vmatpush1.msra.mxu0 %v184
  %784 = vmatprep.subr.mxu0 0.0
  %785 = vmatpush1.msra.mxu0 %v185
  %786 = vmatprep.subr.mxu0 0.0
  %787 = vmatpush1.msra.mxu0 %v186
  %788 = vmatprep.subr.mxu0 0.0
  %789 = vmatpush1.msra.mxu0 %v187
  %790 = vmatprep.subr.mxu0 0.0
  %791 = vmatpush1.msra.mxu0 %v188
  %792 = vmatprep.subr.mxu0 0.0
  %793 = vmatpush1.msra.mxu0 %v189
  %794 = vmatprep.subr.mxu0 0.0
  %795 = vmatpush1.msra.mxu0 %v190
  %796 = vmatprep.subr.mxu0 0.0
  %797 = vmatpush1.msra.mxu0 %v191
  %798 = vmatprep.subr.mxu0 0.0
  %799 = vmatpush1.msra.mxu0 %v192
  %800 = vmatprep.subr.mxu0 0.0
  %801 = vmatpush1.msra.mxu0 %v193
  %802 = vmatprep.subr.mxu0 0.0
  %803 = vmatpush1.msra.mxu0 %v194
  %804 = vmatprep.subr.mxu0 0.0
  %805 = vmatpush1.msra.mxu0 %v195
  %806 = vmatprep.subr.mxu0 0.0
  %807 = vmatpush1.msra.mxu0 %v196
  %808 = vmatprep.subr.mxu0 0.0
  %809 = vmatpush1.msra.mxu0 %v197
  %810 = vmatprep.subr.mxu0 0.0
  %811 = vmatpush1.msra.mxu0 %v198
  %812 = vmatprep.subr.mxu0 0.0
  %813 = vmatpush1.msra.mxu0 %v199
  %814 = vmatprep.subr.mxu0 0.0
  %815 = vmatpush1.msra.mxu0 %v200
  %816 = vmatprep.subr.mxu0 0.0
  %817 = vmatpush1.msra.mxu0 %v201
  %818 = vmatprep.subr.mxu0 0.0
  %819 = vmatpush1.msra.mxu0 %v202
  %820 = vmatprep.subr.mxu0 0.0
  %821 = vmatpush1.msra.mxu0 %v203
  %822 = vmatprep.subr.mxu0 0.0
  %823 = vmatpush1.msra.mxu0 %v204
  %824 = vmatprep.subr.mxu0 0.0
  %825 = vmatpush1.msra.mxu0 %v205
  %826 = vmatprep.mubr.f32.mxu0 %v83
  %827 = vmatmul.mubr.f32.gmra.mrb[0].mxu0 %v82
  %v828 = vpop.f32.mrb[0].mxu0
  %v829 = vadd.f32 %v759, %v828
  %v830 = vpop.f32.mrb[0].mxu0
  %831 = vdwg.mxu0
  %832 = vmatprep.subr.mxu0 0.0
  %833 = vmatpush1.msra.mxu0 %v206
  %834 = vmatprep.subr.mxu0 0.0
  %835 = vmatpush1.msra.mxu0 %v207
  %836 = vmatprep.subr.mxu0 0.0
  %837 = vmatpush1.msra.mxu0 %v208
  %838 = vmatprep.subr.mxu0 0.0
  %839 = vmatpush1.msra.mxu0 %v209
  %840 = vmatprep.subr.mxu0 0.0
  %841 = vmatpush1.msra.mxu0 %v210
  %842 = vmatprep.subr.mxu0 0.0
  %843 = vmatpush1.msra.mxu0 %v211
  %844 = vmatprep.subr.mxu0 0.0
  %845 = vmatpush1.msra.mxu0 %v212
  %846 = vmatprep.subr.mxu0 0.0
  %847 = vmatpush1.msra.mxu0 %v213
  %848 = vmatprep.subr.mxu0 0.0
  %849 = vmatpush1.msra.mxu0 %v214
  %850 = vmatprep.subr.mxu0 0.0
  %851 = vmatpush1.msra.mxu0 %v215
  %852 = vmatprep.subr.mxu0 0.0
  %853 = vmatpush1.msra.mxu0 %v216
  %854 = vmatprep.subr.mxu0 0.0
  %855 = vmatpush1.msra.mxu0 %v217
  %856 = vmatprep.subr.mxu0 0.0
  %857 = vmatpush1.msra.mxu0 %v218
  %858 = vmatprep.subr.mxu0 0.0
  %859 = vmatpush1.msra.mxu0 %v219
  %860 = vmatprep.subr.mxu0 0.0
  %861 = vmatpush1.msra.mxu0 %v220
  %862 = vmatprep.subr.mxu0 0.0
  %863 = vmatpush1.msra.mxu0 %v221
  %864 = vmatprep.subr.mxu0 0.0
  %865 = vmatpush1.msra.mxu0 %v222
  %866 = vmatprep.subr.mxu0 0.0
  %867 = vmatpush1.msra.mxu0 %v223
  %868 = vmatprep.subr.mxu0 0.0
  %869 = vmatpush1.msra.mxu0 %v224
  %870 = vmatprep.subr.mxu0 0.0
  %871 = vmatpush1.msra.mxu0 %v225
  %872 = vmatprep.subr.mxu0 0.0
  %873 = vmatpush1.msra.mxu0 %v226
  %874 = vmatprep.subr.mxu0 0.0
  %875 = vmatpush1.msra.mxu0 %v227
  %876 = vmatprep.subr.mxu0 0.0
  %877 = vmatpush1.msra.mxu0 %v228
  %878 = vmatprep.subr.mxu0 0.0
  %879 = vmatpush1.msra.mxu0 %v229
  %880 = vmatprep.subr.mxu0 0.0
  %881 = vmatpush1.msra.mxu0 %v230
  %882 = vmatprep.subr.mxu0 0.0
  %883 = vmatpush1.msra.mxu0 %v231
  %884 = vmatprep.subr.mxu0 0.0
  %885 = vmatpush1.msra.mxu0 %v232
  %886 = vmatprep.subr.mxu0 0.0
  %887 = vmatpush1.msra.mxu0 %v233
  %888 = vmatprep.subr.mxu0 0.0
  %889 = vmatpush1.msra.mxu0 %v234
  %890 = vmatprep.subr.mxu0 0.0
  %891 = vmatpush1.msra.mxu0 %v235
  %892 = vmatprep.subr.mxu0 0.0
  %893 = vmatpush1.msra.mxu0 %v236
  %894 = vmatprep.subr.mxu0 0.0
  %895 = vmatpush1.msra.mxu0 %v237
  %896 = vmatprep.mubr.f32.mxu0 %v85
  %897 = vmatmul.mubr.f32.gmra.mrb[0].mxu0 %v84
  %v898 = vpop.f32.mrb[0].mxu0
  %v899 = vadd.f32 %v829, %v898
  %v900 = vpop.f32.mrb[0].mxu0
  %901 = vdwg.mxu0
  %902 = vmatprep.subr.mxu0 0.0
  %903 = vmatpush1.msra.mxu0 %v238
  %904 = vmatprep.subr.mxu0 0.0
  %905 = vmatpush1.msra.mxu0 %v239
  %906 = vmatprep.subr.mxu0 0.0
  %907 = vmatpush1.msra.mxu0 %v240
  %908 = vmatprep.subr.mxu0 0.0
  %909 = vmatpush1.msra.mxu0 %v241
  %910 = vmatprep.subr.mxu0 0.0
  %911 = vmatpush1.msra.mxu0 %v242
  %912 = vmatprep.subr.mxu0 0.0
  %913 = vmatpush1.msra.mxu0 %v243
  %914 = vmatprep.subr.mxu0 0.0
  %915 = vmatpush1.msra.mxu0 %v244
  %916 = vmatprep.subr.mxu0 0.0
  %917 = vmatpush1.msra.mxu0 %v245
  %918 = vmatprep.subr.mxu0 0.0
  %919 = vmatpush1.msra.mxu0 %v246
  %920 = vmatprep.subr.mxu0 0.0
  %921 = vmatpush1.msra.mxu0 %v247
  %922 = vmatprep.subr.mxu0 0.0
  %923 = vmatpush1.msra.mxu0 %v248
  %924 = vmatprep.subr.mxu0 0.0
  %925 = vmatpush1.msra.mxu0 %v249
  %926 = vmatprep.subr.mxu0 0.0
  %927 = vmatpush1.msra.mxu0 %v250
  %928 = vmatprep.subr.mxu0 0.0
  %929 = vmatpush1.msra.mxu0 %v251
  %930 = vmatprep.subr.mxu0 0.0
  %931 = vmatpush1.msra.mxu0 %v252
  %932 = vmatprep.subr.mxu0 0.0
  %933 = vmatpush1.msra.mxu0 %v253
  %934 = vmatprep.subr.mxu0 0.0
  %935 = vmatpush1.msra.mxu0 %v254
  %936 = vmatprep.subr.mxu0 0.0
  %937 = vmatpush1.msra.mxu0 %v255
  %938 = vmatprep.subr.mxu0 0.0
  %939 = vmatpush1.msra.mxu0 %v256
  %940 = vmatprep.subr.mxu0 0.0
  %941 = vmatpush1.msra.mxu0 %v257
  %942 = vmatprep.subr.mxu0 0.0
  %943 = vmatpush1.msra.mxu0 %v258
  %944 = vmatprep.subr.mxu0 0.0
  %945 = vmatpush1.msra.mxu0 %v259
  %946 = vmatprep.subr.mxu0 0.0
  %947 = vmatpush1.msra.mxu0 %v260
  %948 = vmatprep.subr.mxu0 0.0
  %949 = vmatpush1.msra.mxu0 %v261
  %950 = vmatprep.subr.mxu0 0.0
  %951 = vmatpush1.msra.mxu0 %v262
  %952 = vmatprep.subr.mxu0 0.0
  %953 = vmatpush1.msra.mxu0 %v263
  %954 = vmatprep.subr.mxu0 0.0
  %955 = vmatpush1.msra.mxu0 %v264
  %956 = vmatprep.subr.mxu0 0.0
  %957 = vmatpush1.msra.mxu0 %v265
  %958 = vmatprep.subr.mxu0 0.0
  %959 = vmatpush1.msra.mxu0 %v266
  %960 = vmatprep.subr.mxu0 0.0
  %961 = vmatpush1.msra.mxu0 %v267
  %962 = vmatprep.subr.mxu0 0.0
  %963 = vmatpush1.msra.mxu0 %v268
  %964 = vmatprep.subr.mxu0 0.0
  %965 = vmatpush1.msra.mxu0 %v269
  %966 = vmatprep.mubr.f32.mxu0 %v87
  %967 = vmatmul.mubr.f32.gmra.mrb[0].mxu0 %v86
  %v968 = vpop.f32.mrb[0].mxu0
  %v969 = vadd.f32 %v899, %v968
  %v970 = vpop.f32.mrb[0].mxu0
  %971 = vdwg.mxu0
  %972 = vmatprep.subr.mxu0 0.0
  %973 = vmatpush1.msra.mxu0 %v270
  %974 = vmatprep.subr.mxu0 0.0
  %975 = vmatpush1.msra.mxu0 %v271
  %976 = vmatprep.subr.mxu0 0.0
  %977 = vmatpush1.msra.mxu0 %v272
  %978 = vmatprep.subr.mxu0 0.0
  %979 = vmatpush1.msra.mxu0 %v273
  %980 = vmatprep.subr.mxu0 0.0
  %981 = vmatpush1.msra.mxu0 %v274
  %982 = vmatprep.subr.mxu0 0.0
  %983 = vmatpush1.msra.mxu0 %v275
  %984 = vmatprep.subr.mxu0 0.0
  %985 = vmatpush1.msra.mxu0 %v276
  %986 = vmatprep.subr.mxu0 0.0
  %987 = vmatpush1.msra.mxu0 %v277
  %988 = vmatprep.subr.mxu0 0.0
  %989 = vmatpush1.msra.mxu0 %v278
  %990 = vmatprep.subr.mxu0 0.0
  %991 = vmatpush1.msra.mxu0 %v279
  %992 = vmatprep.subr.mxu0 0.0
  %993 = vmatpush1.msra.mxu0 %v280
  %994 = vmatprep.subr.mxu0 0.0
  %995 = vmatpush1.msra.mxu0 %v281
  %996 = vmatprep.subr.mxu0 0.0
  %997 = vmatpush1.msra.mxu0 %v282
  %998 = vmatprep.subr.mxu0 0.0
  %999 = vmatpush1.msra.mxu0 %v283
  %1000 = vmatprep.subr.mxu0 0.0
  %1001 = vmatpush1.msra.mxu0 %v284
  %1002 = vmatprep.subr.mxu0 0.0
  %1003 = vmatpush1.msra.mxu0 %v285
  %1004 = vmatprep.subr.mxu0 0.0
  %1005 = vmatpush1.msra.mxu0 %v286
  %1006 = vmatprep.subr.mxu0 0.0
  %1007 = vmatpush1.msra.mxu0 %v287
  %1008 = vmatprep.subr.mxu0 0.0
  %1009 = vmatpush1.msra.mxu0 %v288
  %1010 = vmatprep.subr.mxu0 0.0
  %1011 = vmatpush1.msra.mxu0 %v289
  %1012 = vmatprep.subr.mxu0 0.0
  %1013 = vmatpush1.msra.mxu0 %v290
  %1014 = vmatprep.subr.mxu0 0.0
  %1015 = vmatpush1.msra.mxu0 %v291
  %1016 = vmatprep.subr.mxu0 0.0
  %1017 = vmatpush1.msra.mxu0 %v292
  %1018 = vmatprep.subr.mxu0 0.0
  %1019 = vmatpush1.msra.mxu0 %v293
  %1020 = vmatprep.subr.mxu0 0.0
  %1021 = vmatpush1.msra.mxu0 %v294
  %1022 = vmatprep.subr.mxu0 0.0
  %1023 = vmatpush1.msra.mxu0 %v295
  %1024 = vmatprep.subr.mxu0 0.0
  %1025 = vmatpush1.msra.mxu0 %v296
  %1026 = vmatprep.subr.mxu0 0.0
  %1027 = vmatpush1.msra.mxu0 %v297
  %1028 = vmatprep.subr.mxu0 0.0
  %1029 = vmatpush1.msra.mxu0 %v298
  %1030 = vmatprep.subr.mxu0 0.0
  %1031 = vmatpush1.msra.mxu0 %v299
  %1032 = vmatprep.subr.mxu0 0.0
  %1033 = vmatpush1.msra.mxu0 %v300
  %1034 = vmatprep.subr.mxu0 0.0
  %1035 = vmatpush1.msra.mxu0 %v301
  %1036 = vmatprep.mubr.f32.mxu0 %v89
  %1037 = vmatmul.mubr.f32.gmra.mrb[0].mxu0 %v88
  %v1038 = vpop.f32.mrb[0].mxu0
  %v1039 = vadd.f32 %v969, %v1038
  %v1040 = vpop.f32.mrb[0].mxu0
  %1041 = vdwg.mxu0
  %1042 = vmatprep.subr.mxu0 0.0
  %1043 = vmatpush1.msra.mxu0 %v302
  %1044 = vmatprep.subr.mxu0 0.0
  %1045 = vmatpush1.msra.mxu0 %v303
  %1046 = vmatprep.subr.mxu0 0.0
  %1047 = vmatpush1.msra.mxu0 %v304
  %1048 = vmatprep.subr.mxu0 0.0
  %1049 = vmatpush1.msra.mxu0 %v305
  %1050 = vmatprep.subr.mxu0 0.0
  %1051 = vmatpush1.msra.mxu0 %v306
  %1052 = vmatprep.subr.mxu0 0.0
  %1053 = vmatpush1.msra.mxu0 %v307
  %1054 = vmatprep.subr.mxu0 0.0
  %1055 = vmatpush1.msra.mxu0 %v308
  %1056 = vmatprep.subr.mxu0 0.0
  %1057 = vmatpush1.msra.mxu0 %v309
  %1058 = vmatprep.subr.mxu0 0.0
  %1059 = vmatpush1.msra.mxu0 %v310
  %1060 = vmatprep.subr.mxu0 0.0
  %1061 = vmatpush1.msra.mxu0 %v311
  %1062 = vmatprep.subr.mxu0 0.0
  %1063 = vmatpush1.msra.mxu0 %v312
  %1064 = vmatprep.subr.mxu0 0.0
  %1065 = vmatpush1.msra.mxu0 %v313
  %1066 = vmatprep.subr.mxu0 0.0
  %1067 = vmatpush1.msra.mxu0 %v314
  %1068 = vmatprep.subr.mxu0 0.0
  %1069 = vmatpush1.msra.mxu0 %v315
  %1070 = vmatprep.subr.mxu0 0.0
  %1071 = vmatpush1.msra.mxu0 %v316
  %1072 = vmatprep.subr.mxu0 0.0
  %1073 = vmatpush1.msra.mxu0 %v317
  %1074 = vmatprep.subr.mxu0 0.0
  %1075 = vmatpush1.msra.mxu0 %v318
  %1076 = vmatprep.subr.mxu0 0.0
  %1077 = vmatpush1.msra.mxu0 %v319
  %1078 = vmatprep.subr.mxu0 0.0
  %1079 = vmatpush1.msra.mxu0 %v320
  %1080 = vmatprep.subr.mxu0 0.0
  %1081 = vmatpush1.msra.mxu0 %v321
  %1082 = vmatprep.subr.mxu0 0.0
  %1083 = vmatpush1.msra.mxu0 %v322
  %1084 = vmatprep.subr.mxu0 0.0
  %1085 = vmatpush1.msra.mxu0 %v323
  %1086 = vmatprep.subr.mxu0 0.0
  %1087 = vmatpush1.msra.mxu0 %v324
  %1088 = vmatprep.subr.mxu0 0.0
  %1089 = vmatpush1.msra.mxu0 %v325
  %1090 = vmatprep.subr.mxu0 0.0
  %1091 = vmatpush1.msra.mxu0 %v326
  %1092 = vmatprep.subr.mxu0 0.0
  %1093 = vmatpush1.msra.mxu0 %v327
  %1094 = vmatprep.subr.mxu0 0.0
  %1095 = vmatpush1.msra.mxu0 %v328
  %1096 = vmatprep.subr.mxu0 0.0
  %1097 = vmatpush1.msra.mxu0 %v329
  %1098 = vmatprep.subr.mxu0 0.0
  %1099 = vmatpush1.msra.mxu0 %v330
  %1100 = vmatprep.subr.mxu0 0.0
  %1101 = vmatpush1.msra.mxu0 %v331
  %1102 = vmatprep.subr.mxu0 0.0
  %1103 = vmatpush1.msra.mxu0 %v332
  %1104 = vmatprep.subr.mxu0 0.0
  %1105 = vmatpush1.msra.mxu0 %v333
  %1106 = vmatprep.mubr.f32.mxu0 %v91
  %1107 = vmatmul.mubr.f32.gmra.mrb[0].mxu0 %v90
  %v1108 = vpop.f32.mrb[0].mxu0
  %v1109 = vadd.f32 %v1039, %v1108
  %v1110 = vpop.f32.mrb[0].mxu0
  %1111 = vdwg.mxu0
  %1112 = vmatprep.subr.mxu0 0.0
  %1113 = vmatpush1.msra.mxu0 %v334
  %1114 = vmatprep.subr.mxu0 0.0
  %1115 = vmatpush1.msra.mxu0 %v335
  %1116 = vmatprep.subr.mxu0 0.0
  %1117 = vmatpush1.msra.mxu0 %v336
  %1118 = vmatprep.subr.mxu0 0.0
  %1119 = vmatpush1.msra.mxu0 %v337
  %1120 = vmatprep.subr.mxu0 0.0
  %1121 = vmatpush1.msra.mxu0 %v338
  %1122 = vmatprep.subr.mxu0 0.0
  %1123 = vmatpush1.msra.mxu0 %v339
  %1124 = vmatprep.subr.mxu0 0.0
  %1125 = vmatpush1.msra.mxu0 %v340
  %1126 = vmatprep.subr.mxu0 0.0
  %1127 = vmatpush1.msra.mxu0 %v341
  %1128 = vmatprep.subr.mxu0 0.0
  %1129 = vmatpush1.msra.mxu0 %v342
  %1130 = vmatprep.subr.mxu0 0.0
  %1131 = vmatpush1.msra.mxu0 %v343
  %1132 = vmatprep.subr.mxu0 0.0
  %1133 = vmatpush1.msra.mxu0 %v344
  %1134 = vmatprep.subr.mxu0 0.0
  %1135 = vmatpush1.msra.mxu0 %v345
  %1136 = vmatprep.subr.mxu0 0.0
  %1137 = vmatpush1.msra.mxu0 %v346
  %1138 = vmatprep.subr.mxu0 0.0
  %1139 = vmatpush1.msra.mxu0 %v347
  %1140 = vmatprep.subr.mxu0 0.0
  %1141 = vmatpush1.msra.mxu0 %v348
  %1142 = vmatprep.subr.mxu0 0.0
  %1143 = vmatpush1.msra.mxu0 %v349
  %1144 = vmatprep.subr.mxu0 0.0
  %1145 = vmatpush1.msra.mxu0 %v350
  %1146 = vmatprep.subr.mxu0 0.0
  %1147 = vmatpush1.msra.mxu0 %v351
  %1148 = vmatprep.subr.mxu0 0.0
  %1149 = vmatpush1.msra.mxu0 %v352
  %1150 = vmatprep.subr.mxu0 0.0
  %1151 = vmatpush1.msra.mxu0 %v353
  %1152 = vmatprep.subr.mxu0 0.0
  %1153 = vmatpush1.msra.mxu0 %v354
  %1154 = vmatprep.subr.mxu0 0.0
  %1155 = vmatpush1.msra.mxu0 %v355
  %1156 = vmatprep.subr.mxu0 0.0
  %1157 = vmatpush1.msra.mxu0 %v356
  %1158 = vmatprep.subr.mxu0 0.0
  %1159 = vmatpush1.msra.mxu0 %v357
  %1160 = vmatprep.subr.mxu0 0.0
  %1161 = vmatpush1.msra.mxu0 %v358
  %1162 = vmatprep.subr.mxu0 0.0
  %1163 = vmatpush1.msra.mxu0 %v359
  %1164 = vmatprep.subr.mxu0 0.0
  %1165 = vmatpush1.msra.mxu0 %v360
  %1166 = vmatprep.subr.mxu0 0.0
  %1167 = vmatpush1.msra.mxu0 %v361
  %1168 = vmatprep.subr.mxu0 0.0
  %1169 = vmatpush1.msra.mxu0 %v362
  %1170 = vmatprep.subr.mxu0 0.0
  %1171 = vmatpush1.msra.mxu0 %v363
  %1172 = vmatprep.subr.mxu0 0.0
  %1173 = vmatpush1.msra.mxu0 %v364
  %1174 = vmatprep.subr.mxu0 0.0
  %1175 = vmatpush1.msra.mxu0 %v365
  %1176 = vmatprep.mubr.f32.mxu0 %v93
  %1177 = vmatmul.mubr.f32.gmra.mrb[0].mxu0 %v92
  %v1178 = vpop.f32.mrb[0].mxu0
  %v1179 = vadd.f32 %v1109, %v1178
  %v1180 = vpop.f32.mrb[0].mxu0
  %1181 = vdwg.mxu0
  %1182 = vmatprep.subr.mxu0 0.0
  %1183 = vmatpush1.msra.mxu0 %v366
  %1184 = vmatprep.subr.mxu0 0.0
  %1185 = vmatpush1.msra.mxu0 %v367
  %1186 = vmatprep.subr.mxu0 0.0
  %1187 = vmatpush1.msra.mxu0 %v368
  %1188 = vmatprep.subr.mxu0 0.0
  %1189 = vmatpush1.msra.mxu0 %v369
  %1190 = vmatprep.subr.mxu0 0.0
  %1191 = vmatpush1.msra.mxu0 %v370
  %1192 = vmatprep.subr.mxu0 0.0
  %1193 = vmatpush1.msra.mxu0 %v371
  %1194 = vmatprep.subr.mxu0 0.0
  %1195 = vmatpush1.msra.mxu0 %v372
  %1196 = vmatprep.subr.mxu0 0.0
  %1197 = vmatpush1.msra.mxu0 %v373
  %1198 = vmatprep.subr.mxu0 0.0
  %1199 = vmatpush1.msra.mxu0 %v374
  %1200 = vmatprep.subr.mxu0 0.0
  %1201 = vmatpush1.msra.mxu0 %v375
  %1202 = vmatprep.subr.mxu0 0.0
  %1203 = vmatpush1.msra.mxu0 %v376
  %1204 = vmatprep.subr.mxu0 0.0
  %1205 = vmatpush1.msra.mxu0 %v377
  %1206 = vmatprep.subr.mxu0 0.0
  %1207 = vmatpush1.msra.mxu0 %v378
  %1208 = vmatprep.subr.mxu0 0.0
  %1209 = vmatpush1.msra.mxu0 %v379
  %1210 = vmatprep.subr.mxu0 0.0
  %1211 = vmatpush1.msra.mxu0 %v380
  %1212 = vmatprep.subr.mxu0 0.0
  %1213 = vmatpush1.msra.mxu0 %v381
  %1214 = vmatprep.subr.mxu0 0.0
  %1215 = vmatpush1.msra.mxu0 %v382
  %1216 = vmatprep.subr.mxu0 0.0
  %1217 = vmatpush1.msra.mxu0 %v383
  %1218 = vmatprep.subr.mxu0 0.0
  %1219 = vmatpush1.msra.mxu0 %v384
  %1220 = vmatprep.subr.mxu0 0.0
  %1221 = vmatpush1.msra.mxu0 %v385
  %1222 = vmatprep.subr.mxu0 0.0
  %1223 = vmatpush1.msra.mxu0 %v386
  %1224 = vmatprep.subr.mxu0 0.0
  %1225 = vmatpush1.msra.mxu0 %v387
  %1226 = vmatprep.subr.mxu0 0.0
  %1227 = vmatpush1.msra.mxu0 %v388
  %1228 = vmatprep.subr.mxu0 0.0
  %1229 = vmatpush1.msra.mxu0 %v389
  %1230 = vmatprep.subr.mxu0 0.0
  %1231 = vmatpush1.msra.mxu0 %v390
  %1232 = vmatprep.subr.mxu0 0.0
  %1233 = vmatpush1.msra.mxu0 %v391
  %1234 = vmatprep.subr.mxu0 0.0
  %1235 = vmatpush1.msra.mxu0 %v392
  %1236 = vmatprep.subr.mxu0 0.0
  %1237 = vmatpush1.msra.mxu0 %v393
  %1238 = vmatprep.subr.mxu0 0.0
  %1239 = vmatpush1.msra.mxu0 %v394
  %1240 = vmatprep.subr.mxu0 0.0
  %1241 = vmatpush1.msra.mxu0 %v395
  %1242 = vmatprep.subr.mxu0 0.0
  %1243 = vmatpush1.msra.mxu0 %v396
  %1244 = vmatprep.subr.mxu0 0.0
  %1245 = vmatpush1.msra.mxu0 %v397
  %1246 = vmatprep.mubr.f32.mxu0 %v95
  %1247 = vmatmul.mubr.f32.gmra.mrb[0].mxu0 %v94
  %v1248 = vpop.f32.mrb[0].mxu0
  %v1249 = vadd.f32 %v1179, %v1248
  %v1250 = vpop.f32.mrb[0].mxu0
  %1251 = vdwg.mxu0
  %1252 = vmatprep.subr.mxu0 0.0
  %1253 = vmatpush1.msra.mxu0 %v398
  %1254 = vmatprep.subr.mxu0 0.0
  %1255 = vmatpush1.msra.mxu0 %v399
  %1256 = vmatprep.subr.mxu0 0.0
  %1257 = vmatpush1.msra.mxu0 %v400
  %1258 = vmatprep.subr.mxu0 0.0
  %1259 = vmatpush1.msra.mxu0 %v401
  %1260 = vmatprep.subr.mxu0 0.0
  %1261 = vmatpush1.msra.mxu0 %v402
  %1262 = vmatprep.subr.mxu0 0.0
  %1263 = vmatpush1.msra.mxu0 %v403
  %1264 = vmatprep.subr.mxu0 0.0
  %1265 = vmatpush1.msra.mxu0 %v404
  %1266 = vmatprep.subr.mxu0 0.0
  %1267 = vmatpush1.msra.mxu0 %v405
  %1268 = vmatprep.subr.mxu0 0.0
  %1269 = vmatpush1.msra.mxu0 %v406
  %1270 = vmatprep.subr.mxu0 0.0
  %1271 = vmatpush1.msra.mxu0 %v407
  %1272 = vmatprep.subr.mxu0 0.0
  %1273 = vmatpush1.msra.mxu0 %v408
  %1274 = vmatprep.subr.mxu0 0.0
  %1275 = vmatpush1.msra.mxu0 %v409
  %1276 = vmatprep.subr.mxu0 0.0
  %1277 = vmatpush1.msra.mxu0 %v410
  %1278 = vmatprep.subr.mxu0 0.0
  %1279 = vmatpush1.msra.mxu0 %v411
  %1280 = vmatprep.subr.mxu0 0.0
  %1281 = vmatpush1.msra.mxu0 %v412
  %1282 = vmatprep.subr.mxu0 0.0
  %1283 = vmatpush1.msra.mxu0 %v413
  %1284 = vmatprep.subr.mxu0 0.0
  %1285 = vmatpush1.msra.mxu0 %v414
  %1286 = vmatprep.subr.mxu0 0.0
  %1287 = vmatpush1.msra.mxu0 %v415
  %1288 = vmatprep.subr.mxu0 0.0
  %1289 = vmatpush1.msra.mxu0 %v416
  %1290 = vmatprep.subr.mxu0 0.0
  %1291 = vmatpush1.msra.mxu0 %v417
  %1292 = vmatprep.subr.mxu0 0.0
  %1293 = vmatpush1.msra.mxu0 %v418
  %1294 = vmatprep.subr.mxu0 0.0
  %1295 = vmatpush1.msra.mxu0 %v419
  %1296 = vmatprep.subr.mxu0 0.0
  %1297 = vmatpush1.msra.mxu0 %v420
  %1298 = vmatprep.subr.mxu0 0.0
  %1299 = vmatpush1.msra.mxu0 %v421
  %1300 = vmatprep.subr.mxu0 0.0
  %1301 = vmatpush1.msra.mxu0 %v422
  %1302 = vmatprep.subr.mxu0 0.0
  %1303 = vmatpush1.msra.mxu0 %v423
  %1304 = vmatprep.subr.mxu0 0.0
  %1305 = vmatpush1.msra.mxu0 %v424
  %1306 = vmatprep.subr.mxu0 0.0
  %1307 = vmatpush1.msra.mxu0 %v425
  %1308 = vmatprep.subr.mxu0 0.0
  %1309 = vmatpush1.msra.mxu0 %v426
  %1310 = vmatprep.subr.mxu0 0.0
  %1311 = vmatpush1.msra.mxu0 %v427
  %1312 = vmatprep.subr.mxu0 0.0
  %1313 = vmatpush1.msra.mxu0 %v428
  %1314 = vmatprep.subr.mxu0 0.0
  %1315 = vmatpush1.msra.mxu0 %v429
  %1316 = vmatprep.mubr.f32.mxu0 %v97
  %1317 = vmatmul.mubr.f32.gmra.mrb[0].mxu0 %v96
  %v1318 = vpop.f32.mrb[0].mxu0
  %v1319 = vadd.f32 %v1249, %v1318
  %v1320 = vpop.f32.mrb[0].mxu0
  %1321 = vdwg.mxu0
  %1322 = vmatprep.subr.mxu0 0.0
  %1323 = vmatpush1.msra.mxu0 %v430
  %1324 = vmatprep.subr.mxu0 0.0
  %1325 = vmatpush1.msra.mxu0 %v431
  %1326 = vmatprep.subr.mxu0 0.0
  %1327 = vmatpush1.msra.mxu0 %v432
  %1328 = vmatprep.subr.mxu0 0.0
  %1329 = vmatpush1.msra.mxu0 %v433
  %1330 = vmatprep.subr.mxu0 0.0
  %1331 = vmatpush1.msra.mxu0 %v434
  %1332 = vmatprep.subr.mxu0 0.0
  %1333 = vmatpush1.msra.mxu0 %v435
  %1334 = vmatprep.subr.mxu0 0.0
  %1335 = vmatpush1.msra.mxu0 %v436
  %1336 = vmatprep.subr.mxu0 0.0
  %1337 = vmatpush1.msra.mxu0 %v437
  %1338 = vmatprep.subr.mxu0 0.0
  %1339 = vmatpush1.msra.mxu0 %v438
  %1340 = vmatprep.subr.mxu0 0.0
  %1341 = vmatpush1.msra.mxu0 %v439
  %1342 = vmatprep.subr.mxu0 0.0
  %1343 = vmatpush1.msra.mxu0 %v440
  %1344 = vmatprep.subr.mxu0 0.0
  %1345 = vmatpush1.msra.mxu0 %v441
  %1346 = vmatprep.subr.mxu0 0.0
  %1347 = vmatpush1.msra.mxu0 %v442
  %1348 = vmatprep.subr.mxu0 0.0
  %1349 = vmatpush1.msra.mxu0 %v443
  %1350 = vmatprep.subr.mxu0 0.0
  %1351 = vmatpush1.msra.mxu0 %v444
  %1352 = vmatprep.subr.mxu0 0.0
  %1353 = vmatpush1.msra.mxu0 %v445
  %1354 = vmatprep.subr.mxu0 0.0
  %1355 = vmatpush1.msra.mxu0 %v446
  %1356 = vmatprep.subr.mxu0 0.0
  %1357 = vmatpush1.msra.mxu0 %v447
  %1358 = vmatprep.subr.mxu0 0.0
  %1359 = vmatpush1.msra.mxu0 %v448
  %1360 = vmatprep.subr.mxu0 0.0
  %1361 = vmatpush1.msra.mxu0 %v449
  %1362 = vmatprep.subr.mxu0 0.0
  %1363 = vmatpush1.msra.mxu0 %v450
  %1364 = vmatprep.subr.mxu0 0.0
  %1365 = vmatpush1.msra.mxu0 %v451
  %1366 = vmatprep.subr.mxu0 0.0
  %1367 = vmatpush1.msra.mxu0 %v452
  %1368 = vmatprep.subr.mxu0 0.0
  %1369 = vmatpush1.msra.mxu0 %v453
  %1370 = vmatprep.subr.mxu0 0.0
  %1371 = vmatpush1.msra.mxu0 %v454
  %1372 = vmatprep.subr.mxu0 0.0
  %1373 = vmatpush1.msra.mxu0 %v455
  %1374 = vmatprep.subr.mxu0 0.0
  %1375 = vmatpush1.msra.mxu0 %v456
  %1376 = vmatprep.subr.mxu0 0.0
  %1377 = vmatpush1.msra.mxu0 %v457
  %1378 = vmatprep.subr.mxu0 0.0
  %1379 = vmatpush1.msra.mxu0 %v458
  %1380 = vmatprep.subr.mxu0 0.0
  %1381 = vmatpush1.msra.mxu0 %v459
  %1382 = vmatprep.subr.mxu0 0.0
  %1383 = vmatpush1.msra.mxu0 %v460
  %1384 = vmatprep.subr.mxu0 0.0
  %1385 = vmatpush1.msra.mxu0 %v461
  %1386 = vmatprep.mubr.f32.mxu0 %v99
  %1387 = vmatmul.mubr.f32.gmra.mrb[0].mxu0 %v98
  %v1388 = vpop.f32.mrb[0].mxu0
  %v1389 = vadd.f32 %v1319, %v1388
  %v1390 = vpop.f32.mrb[0].mxu0
  %1391 = vdwg.mxu0
  %1392 = vmatprep.subr.mxu0 0.0
  %1393 = vmatpush1.msra.mxu0 %v462
  %1394 = vmatprep.subr.mxu0 0.0
  %1395 = vmatpush1.msra.mxu0 %v463
  %1396 = vmatprep.subr.mxu0 0.0
  %1397 = vmatpush1.msra.mxu0 %v464
  %1398 = vmatprep.subr.mxu0 0.0
  %1399 = vmatpush1.msra.mxu0 %v465
  %1400 = vmatprep.subr.mxu0 0.0
  %1401 = vmatpush1.msra.mxu0 %v466
  %1402 = vmatprep.subr.mxu0 0.0
  %1403 = vmatpush1.msra.mxu0 %v467
  %1404 = vmatprep.subr.mxu0 0.0
  %1405 = vmatpush1.msra.mxu0 %v468
  %1406 = vmatprep.subr.mxu0 0.0
  %1407 = vmatpush1.msra.mxu0 %v469
  %1408 = vmatprep.subr.mxu0 0.0
  %1409 = vmatpush1.msra.mxu0 %v470
  %1410 = vmatprep.subr.mxu0 0.0
  %1411 = vmatpush1.msra.mxu0 %v471
  %1412 = vmatprep.subr.mxu0 0.0
  %1413 = vmatpush1.msra.mxu0 %v472
  %1414 = vmatprep.subr.mxu0 0.0
  %1415 = vmatpush1.msra.mxu0 %v473
  %1416 = vmatprep.subr.mxu0 0.0
  %1417 = vmatpush1.msra.mxu0 %v474
  %1418 = vmatprep.subr.mxu0 0.0
  %1419 = vmatpush1.msra.mxu0 %v475
  %1420 = vmatprep.subr.mxu0 0.0
  %1421 = vmatpush1.msra.mxu0 %v476
  %1422 = vmatprep.subr.mxu0 0.0
  %1423 = vmatpush1.msra.mxu0 %v477
  %1424 = vmatprep.subr.mxu0 0.0
  %1425 = vmatpush1.msra.mxu0 %v478
  %1426 = vmatprep.subr.mxu0 0.0
  %1427 = vmatpush1.msra.mxu0 %v479
  %1428 = vmatprep.subr.mxu0 0.0
  %1429 = vmatpush1.msra.mxu0 %v480
  %1430 = vmatprep.subr.mxu0 0.0
  %1431 = vmatpush1.msra.mxu0 %v481
  %1432 = vmatprep.subr.mxu0 0.0
  %1433 = vmatpush1.msra.mxu0 %v482
  %1434 = vmatprep.subr.mxu0 0.0
  %1435 = vmatpush1.msra.mxu0 %v483
  %1436 = vmatprep.subr.mxu0 0.0
  %1437 = vmatpush1.msra.mxu0 %v484
  %1438 = vmatprep.subr.mxu0 0.0
  %1439 = vmatpush1.msra.mxu0 %v485
  %1440 = vmatprep.subr.mxu0 0.0
  %1441 = vmatpush1.msra.mxu0 %v486
  %1442 = vmatprep.subr.mxu0 0.0
  %1443 = vmatpush1.msra.mxu0 %v487
  %1444 = vmatprep.subr.mxu0 0.0
  %1445 = vmatpush1.msra.mxu0 %v488
  %1446 = vmatprep.subr.mxu0 0.0
  %1447 = vmatpush1.msra.mxu0 %v489
  %1448 = vmatprep.subr.mxu0 0.0
  %1449 = vmatpush1.msra.mxu0 %v490
  %1450 = vmatprep.subr.mxu0 0.0
  %1451 = vmatpush1.msra.mxu0 %v491
  %1452 = vmatprep.subr.mxu0 0.0
  %1453 = vmatpush1.msra.mxu0 %v492
  %1454 = vmatprep.subr.mxu0 0.0
  %1455 = vmatpush1.msra.mxu0 %v493
  %1456 = vmatprep.mubr.f32.mxu0 %v101
  %1457 = vmatmul.mubr.f32.gmra.mrb[0].mxu0 %v100
  %v1458 = vpop.f32.mrb[0].mxu0
  %v1459 = vadd.f32 %v1389, %v1458
  %v1460 = vpop.f32.mrb[0].mxu0
  %1461 = vdwg.mxu0
  %1462 = vmatprep.subr.mxu0 0.0
  %1463 = vmatpush1.msra.mxu0 %v494
  %1464 = vmatprep.subr.mxu0 0.0
  %1465 = vmatpush1.msra.mxu0 %v495
  %1466 = vmatprep.subr.mxu0 0.0
  %1467 = vmatpush1.msra.mxu0 %v496
  %1468 = vmatprep.subr.mxu0 0.0
  %1469 = vmatpush1.msra.mxu0 %v497
  %1470 = vmatprep.subr.mxu0 0.0
  %1471 = vmatpush1.msra.mxu0 %v498
  %1472 = vmatprep.subr.mxu0 0.0
  %1473 = vmatpush1.msra.mxu0 %v499
  %1474 = vmatprep.subr.mxu0 0.0
  %1475 = vmatpush1.msra.mxu0 %v500
  %1476 = vmatprep.subr.mxu0 0.0
  %1477 = vmatpush1.msra.mxu0 %v501
  %1478 = vmatprep.subr.mxu0 0.0
  %1479 = vmatpush1.msra.mxu0 %v502
  %1480 = vmatprep.subr.mxu0 0.0
  %1481 = vmatpush1.msra.mxu0 %v503
  %1482 = vmatprep.subr.mxu0 0.0
  %1483 = vmatpush1.msra.mxu0 %v504
  %1484 = vmatprep.subr.mxu0 0.0
  %1485 = vmatpush1.msra.mxu0 %v505
  %1486 = vmatprep.subr.mxu0 0.0
  %1487 = vmatpush1.msra.mxu0 %v506
  %1488 = vmatprep.subr.mxu0 0.0
  %1489 = vmatpush1.msra.mxu0 %v507
  %1490 = vmatprep.subr.mxu0 0.0
  %1491 = vmatpush1.msra.mxu0 %v508
  %1492 = vmatprep.subr.mxu0 0.0
  %1493 = vmatpush1.msra.mxu0 %v509
  %1494 = vmatprep.subr.mxu0 0.0
  %1495 = vmatpush1.msra.mxu0 %v510
  %1496 = vmatprep.subr.mxu0 0.0
  %1497 = vmatpush1.msra.mxu0 %v511
  %1498 = vmatprep.subr.mxu0 0.0
  %1499 = vmatpush1.msra.mxu0 %v512
  %1500 = vmatprep.subr.mxu0 0.0
  %1501 = vmatpush1.msra.mxu0 %v513
  %1502 = vmatprep.subr.mxu0 0.0
  %1503 = vmatpush1.msra.mxu0 %v514
  %1504 = vmatprep.subr.mxu0 0.0
  %1505 = vmatpush1.msra.mxu0 %v515
  %1506 = vmatprep.subr.mxu0 0.0
  %1507 = vmatpush1.msra.mxu0 %v516
  %1508 = vmatprep.subr.mxu0 0.0
  %1509 = vmatpush1.msra.mxu0 %v517
  %1510 = vmatprep.subr.mxu0 0.0
  %1511 = vmatpush1.msra.mxu0 %v518
  %1512 = vmatprep.subr.mxu0 0.0
  %1513 = vmatpush1.msra.mxu0 %v519
  %1514 = vmatprep.subr.mxu0 0.0
  %1515 = vmatpush1.msra.mxu0 %v520
  %1516 = vmatprep.subr.mxu0 0.0
  %1517 = vmatpush1.msra.mxu0 %v521
  %1518 = vmatprep.subr.mxu0 0.0
  %1519 = vmatpush1.msra.mxu0 %v522
  %1520 = vmatprep.subr.mxu0 0.0
  %1521 = vmatpush1.msra.mxu0 %v523
  %1522 = vmatprep.subr.mxu0 0.0
  %1523 = vmatpush1.msra.mxu0 %v524
  %1524 = vmatprep.subr.mxu0 0.0
  %1525 = vmatpush1.msra.mxu0 %v525
  %1526 = vmatprep.mubr.f32.mxu0 %v103
  %1527 = vmatmul.mubr.f32.gmra.mrb[0].mxu0 %v102
  %v1528 = vpop.f32.mrb[0].mxu0
  %v1529 = vadd.f32 %v1459, %v1528
  %v1530 = vpop.f32.mrb[0].mxu0
  %1531 = vdwg.mxu0
  %1532 = vmatprep.subr.mxu0 0.0
  %1533 = vmatpush1.msra.mxu0 %v526
  %1534 = vmatprep.subr.mxu0 0.0
  %1535 = vmatpush1.msra.mxu0 %v527
  %1536 = vmatprep.subr.mxu0 0.0
  %1537 = vmatpush1.msra.mxu0 %v528
  %1538 = vmatprep.subr.mxu0 0.0
  %1539 = vmatpush1.msra.mxu0 %v529
  %1540 = vmatprep.subr.mxu0 0.0
  %1541 = vmatpush1.msra.mxu0 %v530
  %1542 = vmatprep.subr.mxu0 0.0
  %1543 = vmatpush1.msra.mxu0 %v531
  %1544 = vmatprep.subr.mxu0 0.0
  %1545 = vmatpush1.msra.mxu0 %v532
  %1546 = vmatprep.subr.mxu0 0.0
  %1547 = vmatpush1.msra.mxu0 %v533
  %1548 = vmatprep.subr.mxu0 0.0
  %1549 = vmatpush1.msra.mxu0 %v534
  %1550 = vmatprep.subr.mxu0 0.0
  %1551 = vmatpush1.msra.mxu0 %v535
  %1552 = vmatprep.subr.mxu0 0.0
  %1553 = vmatpush1.msra.mxu0 %v536
  %1554 = vmatprep.subr.mxu0 0.0
  %1555 = vmatpush1.msra.mxu0 %v537
  %1556 = vmatprep.subr.mxu0 0.0
  %1557 = vmatpush1.msra.mxu0 %v538
  %1558 = vmatprep.subr.mxu0 0.0
  %1559 = vmatpush1.msra.mxu0 %v539
  %1560 = vmatprep.subr.mxu0 0.0
  %1561 = vmatpush1.msra.mxu0 %v540
  %1562 = vmatprep.subr.mxu0 0.0
  %1563 = vmatpush1.msra.mxu0 %v541
  %1564 = vmatprep.subr.mxu0 0.0
  %1565 = vmatpush1.msra.mxu0 %v542
  %1566 = vmatprep.subr.mxu0 0.0
  %1567 = vmatpush1.msra.mxu0 %v543
  %1568 = vmatprep.subr.mxu0 0.0
  %1569 = vmatpush1.msra.mxu0 %v544
  %1570 = vmatprep.subr.mxu0 0.0
  %1571 = vmatpush1.msra.mxu0 %v545
  %1572 = vmatprep.subr.mxu0 0.0
  %1573 = vmatpush1.msra.mxu0 %v546
  %1574 = vmatprep.subr.mxu0 0.0
  %1575 = vmatpush1.msra.mxu0 %v547
  %1576 = vmatprep.subr.mxu0 0.0
  %1577 = vmatpush1.msra.mxu0 %v548
  %1578 = vmatprep.subr.mxu0 0.0
  %1579 = vmatpush1.msra.mxu0 %v549
  %1580 = vmatprep.subr.mxu0 0.0
  %1581 = vmatpush1.msra.mxu0 %v550
  %1582 = vmatprep.subr.mxu0 0.0
  %1583 = vmatpush1.msra.mxu0 %v551
  %1584 = vmatprep.subr.mxu0 0.0
  %1585 = vmatpush1.msra.mxu0 %v552
  %1586 = vmatprep.subr.mxu0 0.0
  %1587 = vmatpush1.msra.mxu0 %v553
  %1588 = vmatprep.subr.mxu0 0.0
  %1589 = vmatpush1.msra.mxu0 %v554
  %1590 = vmatprep.subr.mxu0 0.0
  %1591 = vmatpush1.msra.mxu0 %v555
  %1592 = vmatprep.subr.mxu0 0.0
  %1593 = vmatpush1.msra.mxu0 %v556
  %1594 = vmatprep.subr.mxu0 0.0
  %1595 = vmatpush1.msra.mxu0 %v557
  %1596 = vmatprep.mubr.f32.mxu0 %v105
  %1597 = vmatmul.mubr.f32.gmra.mrb[0].mxu0 %v104
  %v1598 = vpop.f32.mrb[0].mxu0
  %v1599 = vadd.f32 %v1529, %v1598
  %v1600 = vpop.f32.mrb[0].mxu0
  %1601 = vdwg.mxu0
  %1602 = vmatprep.subr.mxu0 0.0
  %1603 = vmatpush1.msra.mxu0 %v558
  %1604 = vmatprep.subr.mxu0 0.0
  %1605 = vmatpush1.msra.mxu0 %v559
  %1606 = vmatprep.subr.mxu0 0.0
  %1607 = vmatpush1.msra.mxu0 %v560
  %1608 = vmatprep.subr.mxu0 0.0
  %1609 = vmatpush1.msra.mxu0 %v561
  %1610 = vmatprep.subr.mxu0 0.0
  %1611 = vmatpush1.msra.mxu0 %v562
  %1612 = vmatprep.subr.mxu0 0.0
  %1613 = vmatpush1.msra.mxu0 %v563
  %1614 = vmatprep.subr.mxu0 0.0
  %1615 = vmatpush1.msra.mxu0 %v564
  %1616 = vmatprep.subr.mxu0 0.0
  %1617 = vmatpush1.msra.mxu0 %v565
  %1618 = vmatprep.subr.mxu0 0.0
  %1619 = vmatpush1.msra.mxu0 %v566
  %1620 = vmatprep.subr.mxu0 0.0
  %1621 = vmatpush1.msra.mxu0 %v567
  %1622 = vmatprep.subr.mxu0 0.0
  %1623 = vmatpush1.msra.mxu0 %v568
  %1624 = vmatprep.subr.mxu0 0.0
  %1625 = vmatpush1.msra.mxu0 %v569
  %1626 = vmatprep.subr.mxu0 0.0
  %1627 = vmatpush1.msra.mxu0 %v570
  %1628 = vmatprep.subr.mxu0 0.0
  %1629 = vmatpush1.msra.mxu0 %v571
  %1630 = vmatprep.subr.mxu0 0.0
  %1631 = vmatpush1.msra.mxu0 %v572
  %1632 = vmatprep.subr.mxu0 0.0
  %1633 = vmatpush1.msra.mxu0 %v573
  %1634 = vmatprep.subr.mxu0 0.0
  %1635 = vmatpush1.msra.mxu0 %v574
  %1636 = vmatprep.subr.mxu0 0.0
  %1637 = vmatpush1.msra.mxu0 %v575
  %1638 = vmatprep.subr.mxu0 0.0
  %1639 = vmatpush1.msra.mxu0 %v576
  %1640 = vmatprep.subr.mxu0 0.0
  %1641 = vmatpush1.msra.mxu0 %v577
  %1642 = vmatprep.subr.mxu0 0.0
  %1643 = vmatpush1.msra.mxu0 %v578
  %1644 = vmatprep.subr.mxu0 0.0
  %1645 = vmatpush1.msra.mxu0 %v579
  %1646 = vmatprep.subr.mxu0 0.0
  %1647 = vmatpush1.msra.mxu0 %v580
  %1648 = vmatprep.subr.mxu0 0.0
  %1649 = vmatpush1.msra.mxu0 %v581
  %1650 = vmatprep.subr.mxu0 0.0
  %1651 = vmatpush1.msra.mxu0 %v582
  %1652 = vmatprep.subr.mxu0 0.0
  %1653 = vmatpush1.msra.mxu0 %v583
  %1654 = vmatprep.subr.mxu0 0.0
  %1655 = vmatpush1.msra.mxu0 %v584
  %1656 = vmatprep.subr.mxu0 0.0
  %1657 = vmatpush1.msra.mxu0 %v585
  %1658 = vmatprep.subr.mxu0 0.0
  %1659 = vmatpush1.msra.mxu0 %v586
  %1660 = vmatprep.subr.mxu0 0.0
  %1661 = vmatpush1.msra.mxu0 %v587
  %1662 = vmatprep.subr.mxu0 0.0
  %1663 = vmatpush1.msra.mxu0 %v588
  %1664 = vmatprep.subr.mxu0 0.0
  %1665 = vmatpush1.msra.mxu0 %v589
  %1666 = vmatprep.mubr.f32.mxu0 %v107
  %1667 = vmatmul.mubr.f32.gmra.mrb[0].mxu0 %v106
  %v1668 = vpop.f32.mrb[0].mxu0
  %v1669 = vadd.f32 %v1599, %v1668
  %v1670 = vpop.f32.mrb[0].mxu0
  %1671 = vdwg.mxu0
  %1672 = vmatprep.subr.mxu0 0.0
  %1673 = vmatpush1.msra.mxu0 %v590
  %1674 = vmatprep.subr.mxu0 0.0
  %1675 = vmatpush1.msra.mxu0 %v591
  %1676 = vmatprep.subr.mxu0 0.0
  %1677 = vmatpush1.msra.mxu0 %v592
  %1678 = vmatprep.subr.mxu0 0.0
  %1679 = vmatpush1.msra.mxu0 %v593
  %1680 = vmatprep.subr.mxu0 0.0
  %1681 = vmatpush1.msra.mxu0 %v594
  %1682 = vmatprep.subr.mxu0 0.0
  %1683 = vmatpush1.msra.mxu0 %v595
  %1684 = vmatprep.subr.mxu0 0.0
  %1685 = vmatpush1.msra.mxu0 %v596
  %1686 = vmatprep.subr.mxu0 0.0
  %1687 = vmatpush1.msra.mxu0 %v597
  %1688 = vmatprep.subr.mxu0 0.0
  %1689 = vmatpush1.msra.mxu0 %v598
  %1690 = vmatprep.subr.mxu0 0.0
  %1691 = vmatpush1.msra.mxu0 %v599
  %1692 = vmatprep.subr.mxu0 0.0
  %1693 = vmatpush1.msra.mxu0 %v600
  %1694 = vmatprep.subr.mxu0 0.0
  %1695 = vmatpush1.msra.mxu0 %v601
  %1696 = vmatprep.subr.mxu0 0.0
  %1697 = vmatpush1.msra.mxu0 %v602
  %1698 = vmatprep.subr.mxu0 0.0
  %1699 = vmatpush1.msra.mxu0 %v603
  %1700 = vmatprep.subr.mxu0 0.0
  %1701 = vmatpush1.msra.mxu0 %v604
  %1702 = vmatprep.subr.mxu0 0.0
  %1703 = vmatpush1.msra.mxu0 %v605
  %1704 = vmatprep.subr.mxu0 0.0
  %1705 = vmatpush1.msra.mxu0 %v606
  %1706 = vmatprep.subr.mxu0 0.0
  %1707 = vmatpush1.msra.mxu0 %v607
  %1708 = vmatprep.subr.mxu0 0.0
  %1709 = vmatpush1.msra.mxu0 %v608
  %1710 = vmatprep.subr.mxu0 0.0
  %1711 = vmatpush1.msra.mxu0 %v609
  %1712 = vmatprep.subr.mxu0 0.0
  %1713 = vmatpush1.msra.mxu0 %v610
  %1714 = vmatprep.subr.mxu0 0.0
  %1715 = vmatpush1.msra.mxu0 %v611
  %1716 = vmatprep.subr.mxu0 0.0
  %1717 = vmatpush1.msra.mxu0 %v612
  %1718 = vmatprep.subr.mxu0 0.0
  %1719 = vmatpush1.msra.mxu0 %v613
  %1720 = vmatprep.subr.mxu0 0.0
  %1721 = vmatpush1.msra.mxu0 %v614
  %1722 = vmatprep.subr.mxu0 0.0
  %1723 = vmatpush1.msra.mxu0 %v615
  %1724 = vmatprep.subr.mxu0 0.0
  %1725 = vmatpush1.msra.mxu0 %v616
  %1726 = vmatprep.subr.mxu0 0.0
  %1727 = vmatpush1.msra.mxu0 %v617
  %1728 = vmatprep.subr.mxu0 0.0
  %1729 = vmatpush1.msra.mxu0 %v618
  %1730 = vmatprep.subr.mxu0 0.0
  %1731 = vmatpush1.msra.mxu0 %v619
  %1732 = vmatprep.subr.mxu0 0.0
  %1733 = vmatpush1.msra.mxu0 %v620
  %1734 = vmatprep.subr.mxu0 0.0
  %1735 = vmatpush1.msra.mxu0 %v621
  %1736 = vmatprep.mubr.f32.mxu0 %v109
  %1737 = vmatmul.mubr.f32.gmra.mrb[0].mxu0 %v108
  %v1738 = vpop.f32.mrb[0].mxu0
  %v1739 = vadd.f32 %v1669, %v1738
  %v1740 = vpop.f32.mrb[0].mxu0
  %1741 = vdwg.mxu0
  %1742 = vst [vmem:[%s3] sm:$0xff] %v1739
  // Predicated region
  $region14: #{matrix_factorization_forward.1} parent=0 // pred_check
    _
  $region15: #{matrix_factorization_forward.1} parent=0 // pred_check_branch
    %1744 = sbr.rel (0) target = $region17
  $region16: #{matrix_factorization_forward.1} parent=0 // pred_region
    _
  $region17: #{matrix_factorization_forward.1} parent=0 // pred_fallthru
    _
  // Predicated region
  $region18: #{matrix_factorization_forward.1} parent=0 // pred_check
    _
  $region19: #{matrix_factorization_forward.1} parent=0 // pred_check_branch
    %1746 = sbr.rel (0) target = $region21
  $region20: #{matrix_factorization_forward.1} parent=0 // pred_region
    _
  $region21: #{matrix_factorization_forward.1} parent=0 // pred_fallthru
    _

</llo_original>
